<compile_context>
chip_gen: v7x
topology: tpu7x:2x2x1
jax: 0.10.0
libtpu: 0.0.40
codegen_flags: <defaults>
</compile_context>

<pallas_src>
import jax
import jax.numpy as jnp
from jax import lax
from jax.experimental import pallas as pl
from jax.experimental.pallas import tpu as pltpu

C1 = 32          # conv1 output channels
C2 = 64          # conv2 output channels
K = 5            # conv kernel size
PAD = 2          # conv padding


def _round_up(n, m):
    return ((n + m - 1) // m) * m


def gencoder_encoder_kernel(x_ref, w1_ref, b1_ref, w2_ref, b2_ref,
                            wfc_ref, bfc_ref, out_ref,
                            xb_ref, h1_ref, patches_ref, h2_ref, flat_ref):
    # x_ref      : (TB, Lp, 1)      zero-padded input signal (single channel)
    # w1_ref     : (K, C1)          conv1 weights, w1[k, co]
    # b1_ref     : (1, C1)
    # w2_ref     : (K*C1, C2)       conv2 weights, row index = k*C1 + ci
    # b2_ref     : (1, C2)
    # wfc_ref    : (P*C2, DP)       fc weights, row index = p*C2 + c, lanes padded
    # bfc_ref    : (1, DP)
    # out_ref    : (TB, DP)
    # xb_ref     : (TB, Lp, C1)     scratch: x broadcast to C1 lanes (done once)
    # h1_ref     : (TB, L, C1)      scratch: relu(conv1)
    # patches_ref: (TB, L, K*C1)    scratch: im2col patches for conv2
    # h2_ref     : (TB, L, C2)      scratch: relu(conv2)
    # flat_ref   : (TB, P*C2)       scratch: max-pooled + flattened activations
    TB, Lp, _ = x_ref.shape
    L = Lp - 2 * PAD
    P = L // 2

    # ---- conv1 (cin = 1) + ReLU -------------------------------------------
    # Hoist the lane-broadcast of x out of the tap loop (done once per block).
    xb_ref[...] = jnp.broadcast_to(x_ref[...], (TB, Lp, C1))
    acc1 = jnp.zeros((TB, L, C1), jnp.float32) + b1_ref[...]
    for k in range(K):
        acc1 = acc1 + xb_ref[:, k:k + L, :] * w1_ref[k:k + 1, :]
    h1_ref[...] = jnp.maximum(acc1, 0.0)

    # ---- im2col for conv2 (zero fringe rows handle the conv padding) -------
    for k in range(K):
        lo = max(0, PAD - k)
        hi = min(L, L + PAD - k)
        if lo > 0:
            patches_ref[:, :lo, k * C1:(k + 1) * C1] = jnp.zeros(
                (TB, lo, C1), jnp.float32)
        if hi < L:
            patches_ref[:, hi:, k * C1:(k + 1) * C1] = jnp.zeros(
                (TB, L - hi, C1), jnp.float32)
        patches_ref[:, lo:hi, k * C1:(k + 1) * C1] = (
            h1_ref[:, lo + k - PAD:hi + k - PAD, :])

    # ---- conv2 + ReLU: a single (TB*L, 160) x (160, C2) MXU matmul ---------
    acc2 = jnp.dot(patches_ref[...].reshape(TB * L, K * C1), w2_ref[...],
                   preferred_element_type=jnp.float32) + b2_ref[...]
    h2_ref[...] = jnp.maximum(acc2, 0.0).reshape(TB, L, C2)

    # ---- MaxPool1d(2, 2): pack pooled rows lane-dense into (TB, P*C2) ------
    for p in range(P):
        flat_ref[:, p * C2:(p + 1) * C2] = jnp.maximum(
            h2_ref[:, 2 * p, :], h2_ref[:, 2 * p + 1, :])

    # ---- FC: a single (TB, P*C2) x (P*C2, DP) MXU matmul, lane-dense out ---
    out = jnp.dot(flat_ref[...], wfc_ref[...],
                  preferred_element_type=jnp.float32) + bfc_ref[...]
    out_ref[...] = out.astype(out_ref.dtype)


def gencoder_encoder_forward(x, params, latent_dim, batch_tile=8):
    """x: (B, 1, L) float32 (PyTorch NCW).  Returns (B, latent_dim)."""
    w1_t, b1_t, w2_t, b2_t, wfc_t, bfc_t = params
    B, _, L = x.shape
    assert L % 2 == 0, "MaxPool1d(2) path assumes even L"
    P = L // 2
    Lp = L + 2 * PAD
    DP = _round_up(latent_dim, 128)          # lane-dense output width

    # Batch tile: either the whole (small) batch, or a multiple of 8.
    if B <= batch_tile:
        TB = B
    else:
        TB = batch_tile if batch_tile % 8 == 0 else _round_up(batch_tile, 8)
    Bp = _round_up(B, TB)

    # --- glue: layout transforms to kernel-friendly shapes ------------------
    xpad = jnp.pad(x[:, 0, :], ((0, Bp - B), (PAD, PAD)))[..., None]   # (Bp, Lp, 1)
    w1 = jnp.transpose(w1_t[:, 0, :], (1, 0))                          # (K, C1)
    b1 = b1_t[None, :]                                                 # (1, C1)
    w2 = jnp.transpose(w2_t, (2, 1, 0)).reshape(K * C1, C2)            # (K*C1, C2)
    b2 = b2_t[None, :]                                                 # (1, C2)
    # torch flattens (B, C2, P) channel-major: flat index = c*P + p.
    # Kernel flattens (P, C2): flat index = p*C2 + c  ->  rearrange + pad lanes.
    wfc = jnp.transpose(wfc_t.reshape(latent_dim, C2, P), (2, 1, 0))   # (P, C2, D)
    wfc = wfc.reshape(P * C2, latent_dim)                              # (P*C2, D)
    wfc = jnp.pad(wfc, ((0, 0), (0, DP - latent_dim)))                 # (P*C2, DP)
    bfc = jnp.pad(bfc_t, (0, DP - latent_dim))[None, :]                # (1, DP)

    grid_spec = pltpu.PrefetchScalarGridSpec(
        num_scalar_prefetch=0,
        grid=(Bp // TB,),
        in_specs=[
            pl.BlockSpec((TB, Lp, 1), lambda b: (b, 0, 0)),
            pl.BlockSpec((K, C1), lambda b: (0, 0)),
            pl.BlockSpec((1, C1), lambda b: (0, 0)),
            pl.BlockSpec((K * C1, C2), lambda b: (0, 0)),
            pl.BlockSpec((1, C2), lambda b: (0, 0)),
            pl.BlockSpec((P * C2, DP), lambda b: (0, 0)),
            pl.BlockSpec((1, DP), lambda b: (0, 0)),
        ],
        out_specs=pl.BlockSpec((TB, DP), lambda b: (b, 0)),
        scratch_shapes=[
            pltpu.VMEM((TB, Lp, C1), jnp.float32),       # broadcast x
            pltpu.VMEM((TB, L, C1), jnp.float32),        # relu(conv1)
            pltpu.VMEM((TB, L, K * C1), jnp.float32),    # im2col patches
            pltpu.VMEM((TB, L, C2), jnp.float32),        # relu(conv2)
            pltpu.VMEM((TB, P * C2), jnp.float32),       # pooled + flattened
        ],
    )

    out = pl.pallas_call(
        gencoder_encoder_kernel,
        out_shape=jax.ShapeDtypeStruct((Bp, DP), jnp.float32),
        grid_spec=grid_spec,
        compiler_params=pltpu.CompilerParams(dimension_semantics=("parallel",)),
    )(xpad, w1, b1, w2, b2, wfc, bfc)

    return out[:B, :latent_dim]


def ref_forward(x, params):
    """Pure-JAX reference matching the PyTorch forward exactly (NCW layout)."""
    w1_t, b1_t, w2_t, b2_t, wfc_t, bfc_t = params
    dn = ("NCH", "OIH", "NCH")
    h1 = lax.conv_general_dilated(x, w1_t, (1,), [(PAD, PAD)],
                                  dimension_numbers=dn) + b1_t[None, :, None]
    h1 = jnp.maximum(h1, 0.0)
    h2 = lax.conv_general_dilated(h1, w2_t, (1,), [(PAD, PAD)],
                                  dimension_numbers=dn) + b2_t[None, :, None]
    h2 = jnp.maximum(h2, 0.0)
    B, C, L = h2.shape
    pooled = h2.reshape(B, C, L // 2, 2).max(axis=-1)
    flat = pooled.reshape(B, -1)
    return flat @ wfc_t.T + bfc_t[None, :]


if __name__ == "__main__":
    B, L, latent = 16, 16, 10         # small shapes consistent with the module
    key = jax.random.PRNGKey(0)
    ks = jax.random.split(key, 7)

    x = jax.random.normal(ks[0], (B, 1, L), jnp.float32)
    w1_t = jax.random.normal(ks[1], (C1, 1, K), jnp.float32) * 0.2
    b1_t = jax.random.normal(ks[2], (C1,), jnp.float32) * 0.1
    w2_t = jax.random.normal(ks[3], (C2, C1, K), jnp.float32) * 0.1
    b2_t = jax.random.normal(ks[4], (C2,), jnp.float32) * 0.1
    wfc_t = jax.random.normal(ks[5], (latent, C2 * (L // 2)), jnp.float32) * 0.05
    bfc_t = jax.random.normal(ks[6], (latent,), jnp.float32) * 0.1
    params = (w1_t, b1_t, w2_t, b2_t, wfc_t, bfc_t)

    out = gencoder_encoder_forward(x, params, latent)   # grid of 2 batch tiles
    out = jax.block_until_ready(out)

    ref = ref_forward(x, params)
    assert out.shape == (B, latent)
    assert bool(jnp.allclose(out, ref, rtol=1e-3, atol=1e-3)), "mismatch vs reference"

    print("KERNEL_OK")
</pallas_src>

<mosaic_0001>
module attributes {stable_mosaic.version = 11 : i64} {
  func.func @gencoder_encoder_kernel(%arg0: i32, %arg1: memref<8x20x1xf32, #tpu.memory_space<vmem>>, %arg2: memref<5x32xf32, #tpu.memory_space<vmem>>, %arg3: memref<1x32xf32, #tpu.memory_space<vmem>>, %arg4: memref<160x64xf32, #tpu.memory_space<vmem>>, %arg5: memref<1x64xf32, #tpu.memory_space<vmem>>, %arg6: memref<512x128xf32, #tpu.memory_space<vmem>>, %arg7: memref<1x128xf32, #tpu.memory_space<vmem>>, %arg8: memref<8x128xf32, #tpu.memory_space<vmem>>, %arg9: memref<8x20x32xf32, #tpu.memory_space<vmem>>, %arg10: memref<8x16x32xf32, #tpu.memory_space<vmem>>, %arg11: memref<8x16x160xf32, #tpu.memory_space<vmem>>, %arg12: memref<8x16x64xf32, #tpu.memory_space<vmem>>, %arg13: memref<8x512xf32, #tpu.memory_space<vmem>>) attributes {dimension_semantics = [#tpu.dimension_semantics<parallel>], iteration_bounds = array<i64: 2>, scalar_prefetch = 0 : i64, scratch_operands = 5 : i64, tpu.core_type = #tpu.core_type<tc>, window_params = [{transform_indices = @transform_0, window_bounds = array<i64: 8, 20, 1>}, {pipeline_mode = #tpu.pipeline_mode<synchronous>, transform_indices = @transform_1, window_bounds = array<i64: 5, 32>}, {pipeline_mode = #tpu.pipeline_mode<synchronous>, transform_indices = @transform_2, window_bounds = array<i64: 1, 32>}, {pipeline_mode = #tpu.pipeline_mode<synchronous>, transform_indices = @transform_3, window_bounds = array<i64: 160, 64>}, {pipeline_mode = #tpu.pipeline_mode<synchronous>, transform_indices = @transform_4, window_bounds = array<i64: 1, 64>}, {pipeline_mode = #tpu.pipeline_mode<synchronous>, transform_indices = @transform_5, window_bounds = array<i64: 512, 128>}, {pipeline_mode = #tpu.pipeline_mode<synchronous>, transform_indices = @transform_6, window_bounds = array<i64: 1, 128>}, {transform_indices = @transform_7, window_bounds = array<i64: 8, 128>}]} {
    %c0 = arith.constant 0 : index
    %c0_0 = arith.constant 0 : index
    %c0_1 = arith.constant 0 : index
    %0 = vector.load %arg1[%c0, %c0_0, %c0_1] : memref<8x20x1xf32, #tpu.memory_space<vmem>>, vector<8x20x1xf32>
    %1 = vector.shape_cast %0 : vector<8x20x1xf32> to vector<8x20x1xf32>
    %2 = vector.broadcast %1 : vector<8x20x1xf32> to vector<8x20x32xf32>
    %c0_2 = arith.constant 0 : index
    %c0_3 = arith.constant 0 : index
    %c0_4 = arith.constant 0 : index
    %3 = vector.load %arg9[%c0_2, %c0_3, %c0_4] : memref<8x20x32xf32, #tpu.memory_space<vmem>>, vector<8x20x32xf32>
    tpu.vector_store %arg9[%c0_2, %c0_3, %c0_4], %2 {strides = array<i32>} : memref<8x20x32xf32, #tpu.memory_space<vmem>>, vector<8x20x32xf32>,
    %cst = arith.constant 0.000000e+00 : f32
    %4 = vector.broadcast %cst : f32 to vector<8x16x32xf32>
    %c0_5 = arith.constant 0 : index
    %c0_6 = arith.constant 0 : index
    %5 = vector.load %arg3[%c0_5, %c0_6] : memref<1x32xf32, #tpu.memory_space<vmem>>, vector<1x32xf32>
    %6 = vector.shape_cast %5 : vector<1x32xf32> to vector<1x1x32xf32>
    %7 = vector.broadcast %6 : vector<1x1x32xf32> to vector<8x16x32xf32>
    %8 = arith.addf %4, %7 : vector<8x16x32xf32>
    %c0_7 = arith.constant 0 : index
    %c0_8 = arith.constant 0 : index
    %c0_9 = arith.constant 0 : index
    %9 = vector.load %arg9[%c0_7, %c0_8, %c0_9] : memref<8x20x32xf32, #tpu.memory_space<vmem>>, vector<8x16x32xf32>
    %c0_10 = arith.constant 0 : index
    %c0_11 = arith.constant 0 : index
    %10 = vector.load %arg2[%c0_10, %c0_11] : memref<5x32xf32, #tpu.memory_space<vmem>>, vector<1x32xf32>
    %11 = vector.shape_cast %10 : vector<1x32xf32> to vector<1x1x32xf32>
    %12 = vector.broadcast %11 : vector<1x1x32xf32> to vector<8x16x32xf32>
    %13 = arith.mulf %9, %12 : vector<8x16x32xf32>
    %14 = arith.addf %8, %13 : vector<8x16x32xf32>
    %c0_12 = arith.constant 0 : index
    %c1 = arith.constant 1 : index
    %c0_13 = arith.constant 0 : index
    %15 = vector.load %arg9[%c0_12, %c1, %c0_13] : memref<8x20x32xf32, #tpu.memory_space<vmem>>, vector<8x16x32xf32>
    %c1_14 = arith.constant 1 : index
    %c0_15 = arith.constant 0 : index
    %16 = vector.load %arg2[%c1_14, %c0_15] : memref<5x32xf32, #tpu.memory_space<vmem>>, vector<1x32xf32>
    %17 = vector.shape_cast %16 : vector<1x32xf32> to vector<1x1x32xf32>
    %18 = vector.broadcast %17 : vector<1x1x32xf32> to vector<8x16x32xf32>
    %19 = arith.mulf %15, %18 : vector<8x16x32xf32>
    %20 = arith.addf %14, %19 : vector<8x16x32xf32>
    %c0_16 = arith.constant 0 : index
    %c2 = arith.constant 2 : index
    %c0_17 = arith.constant 0 : index
    %21 = vector.load %arg9[%c0_16, %c2, %c0_17] : memref<8x20x32xf32, #tpu.memory_space<vmem>>, vector<8x16x32xf32>
    %c2_18 = arith.constant 2 : index
    %c0_19 = arith.constant 0 : index
    %22 = vector.load %arg2[%c2_18, %c0_19] : memref<5x32xf32, #tpu.memory_space<vmem>>, vector<1x32xf32>
    %23 = vector.shape_cast %22 : vector<1x32xf32> to vector<1x1x32xf32>
    %24 = vector.broadcast %23 : vector<1x1x32xf32> to vector<8x16x32xf32>
    %25 = arith.mulf %21, %24 : vector<8x16x32xf32>
    %26 = arith.addf %20, %25 : vector<8x16x32xf32>
    %c0_20 = arith.constant 0 : index
    %c3 = arith.constant 3 : index
    %c0_21 = arith.constant 0 : index
    %27 = vector.load %arg9[%c0_20, %c3, %c0_21] : memref<8x20x32xf32, #tpu.memory_space<vmem>>, vector<8x16x32xf32>
    %c3_22 = arith.constant 3 : index
    %c0_23 = arith.constant 0 : index
    %28 = vector.load %arg2[%c3_22, %c0_23] : memref<5x32xf32, #tpu.memory_space<vmem>>, vector<1x32xf32>
    %29 = vector.shape_cast %28 : vector<1x32xf32> to vector<1x1x32xf32>
    %30 = vector.broadcast %29 : vector<1x1x32xf32> to vector<8x16x32xf32>
    %31 = arith.mulf %27, %30 : vector<8x16x32xf32>
    %32 = arith.addf %26, %31 : vector<8x16x32xf32>
    %c0_24 = arith.constant 0 : index
    %c4 = arith.constant 4 : index
    %c0_25 = arith.constant 0 : index
    %33 = vector.load %arg9[%c0_24, %c4, %c0_25] : memref<8x20x32xf32, #tpu.memory_space<vmem>>, vector<8x16x32xf32>
    %c4_26 = arith.constant 4 : index
    %c0_27 = arith.constant 0 : index
    %34 = vector.load %arg2[%c4_26, %c0_27] : memref<5x32xf32, #tpu.memory_space<vmem>>, vector<1x32xf32>
    %35 = vector.shape_cast %34 : vector<1x32xf32> to vector<1x1x32xf32>
    %36 = vector.broadcast %35 : vector<1x1x32xf32> to vector<8x16x32xf32>
    %37 = arith.mulf %33, %36 : vector<8x16x32xf32>
    %38 = arith.addf %32, %37 : vector<8x16x32xf32>
    %cst_28 = arith.constant 0.000000e+00 : f32
    %39 = vector.broadcast %cst_28 : f32 to vector<8x16x32xf32>
    %40 = arith.maximumf %38, %39 : vector<8x16x32xf32>
    %c0_29 = arith.constant 0 : index
    %c0_30 = arith.constant 0 : index
    %c0_31 = arith.constant 0 : index
    %41 = vector.load %arg10[%c0_29, %c0_30, %c0_31] : memref<8x16x32xf32, #tpu.memory_space<vmem>>, vector<8x16x32xf32>
    tpu.vector_store %arg10[%c0_29, %c0_30, %c0_31], %40 {strides = array<i32>} : memref<8x16x32xf32, #tpu.memory_space<vmem>>, vector<8x16x32xf32>,
    %cst_32 = arith.constant 0.000000e+00 : f32
    %42 = vector.broadcast %cst_32 : f32 to vector<8x2x32xf32>
    %c0_33 = arith.constant 0 : index
    %c0_34 = arith.constant 0 : index
    %c0_35 = arith.constant 0 : index
    %43 = vector.load %arg11[%c0_33, %c0_34, %c0_35] : memref<8x16x160xf32, #tpu.memory_space<vmem>>, vector<8x2x32xf32>
    tpu.vector_store %arg11[%c0_33, %c0_34, %c0_35], %42 {strides = array<i32>} : memref<8x16x160xf32, #tpu.memory_space<vmem>>, vector<8x2x32xf32>,
    %c0_36 = arith.constant 0 : index
    %c0_37 = arith.constant 0 : index
    %c0_38 = arith.constant 0 : index
    %44 = vector.load %arg10[%c0_36, %c0_37, %c0_38] : memref<8x16x32xf32, #tpu.memory_space<vmem>>, vector<8x14x32xf32>
    %c0_39 = arith.constant 0 : index
    %c2_40 = arith.constant 2 : index
    %c0_41 = arith.constant 0 : index
    %45 = vector.load %arg11[%c0_39, %c2_40, %c0_41] : memref<8x16x160xf32, #tpu.memory_space<vmem>>, vector<8x14x32xf32>
    tpu.vector_store %arg11[%c0_39, %c2_40, %c0_41], %44 {strides = array<i32>} : memref<8x16x160xf32, #tpu.memory_space<vmem>>, vector<8x14x32xf32>,
    %cst_42 = arith.constant 0.000000e+00 : f32
    %46 = vector.broadcast %cst_42 : f32 to vector<8x1x32xf32>
    %c0_43 = arith.constant 0 : index
    %c0_44 = arith.constant 0 : index
    %c32 = arith.constant 32 : index
    %47 = vector.load %arg11[%c0_43, %c0_44, %c32] : memref<8x16x160xf32, #tpu.memory_space<vmem>>, vector<8x1x32xf32>
    tpu.vector_store %arg11[%c0_43, %c0_44, %c32], %46 {strides = array<i32>} : memref<8x16x160xf32, #tpu.memory_space<vmem>>, vector<8x1x32xf32>,
    %c0_45 = arith.constant 0 : index
    %c0_46 = arith.constant 0 : index
    %c0_47 = arith.constant 0 : index
    %48 = vector.load %arg10[%c0_45, %c0_46, %c0_47] : memref<8x16x32xf32, #tpu.memory_space<vmem>>, vector<8x15x32xf32>
    %c0_48 = arith.constant 0 : index
    %c1_49 = arith.constant 1 : index
    %c32_50 = arith.constant 32 : index
    %49 = vector.load %arg11[%c0_48, %c1_49, %c32_50] : memref<8x16x160xf32, #tpu.memory_space<vmem>>, vector<8x15x32xf32>
    tpu.vector_store %arg11[%c0_48, %c1_49, %c32_50], %48 {strides = array<i32>} : memref<8x16x160xf32, #tpu.memory_space<vmem>>, vector<8x15x32xf32>,
    %c0_51 = arith.constant 0 : index
    %c0_52 = arith.constant 0 : index
    %c0_53 = arith.constant 0 : index
    %50 = vector.load %arg10[%c0_51, %c0_52, %c0_53] : memref<8x16x32xf32, #tpu.memory_space<vmem>>, vector<8x16x32xf32>
    %c0_54 = arith.constant 0 : index
    %c0_55 = arith.constant 0 : index
    %c64 = arith.constant 64 : index
    %51 = vector.load %arg11[%c0_54, %c0_55, %c64] : memref<8x16x160xf32, #tpu.memory_space<vmem>>, vector<8x16x32xf32>
    tpu.vector_store %arg11[%c0_54, %c0_55, %c64], %50 {strides = array<i32>} : memref<8x16x160xf32, #tpu.memory_space<vmem>>, vector<8x16x32xf32>,
    %cst_56 = arith.constant 0.000000e+00 : f32
    %52 = vector.broadcast %cst_56 : f32 to vector<8x1x32xf32>
    %c0_57 = arith.constant 0 : index
    %c15 = arith.constant 15 : index
    %c96 = arith.constant 96 : index
    %53 = vector.load %arg11[%c0_57, %c15, %c96] : memref<8x16x160xf32, #tpu.memory_space<vmem>>, vector<8x1x32xf32>
    tpu.vector_store %arg11[%c0_57, %c15, %c96], %52 {strides = array<i32>} : memref<8x16x160xf32, #tpu.memory_space<vmem>>, vector<8x1x32xf32>,
    %c0_58 = arith.constant 0 : index
    %c1_59 = arith.constant 1 : index
    %c0_60 = arith.constant 0 : index
    %54 = vector.load %arg10[%c0_58, %c1_59, %c0_60] : memref<8x16x32xf32, #tpu.memory_space<vmem>>, vector<8x15x32xf32>
    %c0_61 = arith.constant 0 : index
    %c0_62 = arith.constant 0 : index
    %c96_63 = arith.constant 96 : index
    %55 = vector.load %arg11[%c0_61, %c0_62, %c96_63] : memref<8x16x160xf32, #tpu.memory_space<vmem>>, vector<8x15x32xf32>
    tpu.vector_store %arg11[%c0_61, %c0_62, %c96_63], %54 {strides = array<i32>} : memref<8x16x160xf32, #tpu.memory_space<vmem>>, vector<8x15x32xf32>,
    %cst_64 = arith.constant 0.000000e+00 : f32
    %56 = vector.broadcast %cst_64 : f32 to vector<8x2x32xf32>
    %c0_65 = arith.constant 0 : index
    %c14 = arith.constant 14 : index
    %c128 = arith.constant 128 : index
    %57 = vector.load %arg11[%c0_65, %c14, %c128] : memref<8x16x160xf32, #tpu.memory_space<vmem>>, vector<8x2x32xf32>
    tpu.vector_store %arg11[%c0_65, %c14, %c128], %56 {strides = array<i32>} : memref<8x16x160xf32, #tpu.memory_space<vmem>>, vector<8x2x32xf32>,
    %c0_66 = arith.constant 0 : index
    %c2_67 = arith.constant 2 : index
    %c0_68 = arith.constant 0 : index
    %58 = vector.load %arg10[%c0_66, %c2_67, %c0_68] : memref<8x16x32xf32, #tpu.memory_space<vmem>>, vector<8x14x32xf32>
    %c0_69 = arith.constant 0 : index
    %c0_70 = arith.constant 0 : index
    %c128_71 = arith.constant 128 : index
    %59 = vector.load %arg11[%c0_69, %c0_70, %c128_71] : memref<8x16x160xf32, #tpu.memory_space<vmem>>, vector<8x14x32xf32>
    tpu.vector_store %arg11[%c0_69, %c0_70, %c128_71], %58 {strides = array<i32>} : memref<8x16x160xf32, #tpu.memory_space<vmem>>, vector<8x14x32xf32>,
    %c0_72 = arith.constant 0 : index
    %c0_73 = arith.constant 0 : index
    %c0_74 = arith.constant 0 : index
    %60 = vector.load %arg11[%c0_72, %c0_73, %c0_74] : memref<8x16x160xf32, #tpu.memory_space<vmem>>, vector<8x16x160xf32>
    %61 = vector.shape_cast %60 : vector<8x16x160xf32> to vector<128x160xf32>
    %c0_75 = arith.constant 0 : index
    %c0_76 = arith.constant 0 : index
    %62 = vector.load %arg4[%c0_75, %c0_76] : memref<160x64xf32, #tpu.memory_space<vmem>>, vector<160x64xf32>
    %cst_77 = arith.constant dense<0.000000e+00> : vector<128x64xf32>
    %63 = tpu.matmul %61, %62, %cst_77 {dimension_numbers = #tpu.dot_dimension_numbers<[1], [0], [0], [1], [0, 0, 1, 1], [], []>} : vector<128x160xf32>, vector<160x64xf32>, vector<128x64xf32> -> vector<128x64xf32>
    %c0_78 = arith.constant 0 : index
    %c0_79 = arith.constant 0 : index
    %64 = vector.load %arg5[%c0_78, %c0_79] : memref<1x64xf32, #tpu.memory_space<vmem>>, vector<1x64xf32>
    %65 = vector.broadcast %64 : vector<1x64xf32> to vector<128x64xf32>
    %66 = arith.addf %63, %65 : vector<128x64xf32>
    %cst_80 = arith.constant 0.000000e+00 : f32
    %67 = vector.broadcast %cst_80 : f32 to vector<128x64xf32>
    %68 = arith.maximumf %66, %67 : vector<128x64xf32>
    %69 = vector.shape_cast %68 : vector<128x64xf32> to vector<8x16x64xf32>
    %c0_81 = arith.constant 0 : index
    %c0_82 = arith.constant 0 : index
    %c0_83 = arith.constant 0 : index
    %70 = vector.load %arg12[%c0_81, %c0_82, %c0_83] : memref<8x16x64xf32, #tpu.memory_space<vmem>>, vector<8x16x64xf32>
    tpu.vector_store %arg12[%c0_81, %c0_82, %c0_83], %69 {strides = array<i32>} : memref<8x16x64xf32, #tpu.memory_space<vmem>>, vector<8x16x64xf32>,
    %c0_84 = arith.constant 0 : index
    %c0_85 = arith.constant 0 : index
    %c0_86 = arith.constant 0 : index
    %71 = vector.load %arg12[%c0_84, %c0_85, %c0_86] : memref<8x16x64xf32, #tpu.memory_space<vmem>>, vector<8x1x64xf32>
    %72 = vector.shape_cast %71 : vector<8x1x64xf32> to vector<8x64xf32>
    %c0_87 = arith.constant 0 : index
    %c1_88 = arith.constant 1 : index
    %c0_89 = arith.constant 0 : index
    %73 = vector.load %arg12[%c0_87, %c1_88, %c0_89] : memref<8x16x64xf32, #tpu.memory_space<vmem>>, vector<8x1x64xf32>
    %74 = vector.shape_cast %73 : vector<8x1x64xf32> to vector<8x64xf32>
    %75 = arith.maximumf %72, %74 : vector<8x64xf32>
    %c0_90 = arith.constant 0 : index
    %c0_91 = arith.constant 0 : index
    %76 = vector.load %arg13[%c0_90, %c0_91] : memref<8x512xf32, #tpu.memory_space<vmem>>, vector<8x64xf32>
    tpu.vector_store %arg13[%c0_90, %c0_91], %75 {strides = array<i32>} : memref<8x512xf32, #tpu.memory_space<vmem>>, vector<8x64xf32>,
    %c0_92 = arith.constant 0 : index
    %c2_93 = arith.constant 2 : index
    %c0_94 = arith.constant 0 : index
    %77 = vector.load %arg12[%c0_92, %c2_93, %c0_94] : memref<8x16x64xf32, #tpu.memory_space<vmem>>, vector<8x1x64xf32>
    %78 = vector.shape_cast %77 : vector<8x1x64xf32> to vector<8x64xf32>
    %c0_95 = arith.constant 0 : index
    %c3_96 = arith.constant 3 : index
    %c0_97 = arith.constant 0 : index
    %79 = vector.load %arg12[%c0_95, %c3_96, %c0_97] : memref<8x16x64xf32, #tpu.memory_space<vmem>>, vector<8x1x64xf32>
    %80 = vector.shape_cast %79 : vector<8x1x64xf32> to vector<8x64xf32>
    %81 = arith.maximumf %78, %80 : vector<8x64xf32>
    %c0_98 = arith.constant 0 : index
    %c64_99 = arith.constant 64 : index
    %82 = vector.load %arg13[%c0_98, %c64_99] : memref<8x512xf32, #tpu.memory_space<vmem>>, vector<8x64xf32>
    tpu.vector_store %arg13[%c0_98, %c64_99], %81 {strides = array<i32>} : memref<8x512xf32, #tpu.memory_space<vmem>>, vector<8x64xf32>,
    %c0_100 = arith.constant 0 : index
    %c4_101 = arith.constant 4 : index
    %c0_102 = arith.constant 0 : index
    %83 = vector.load %arg12[%c0_100, %c4_101, %c0_102] : memref<8x16x64xf32, #tpu.memory_space<vmem>>, vector<8x1x64xf32>
    %84 = vector.shape_cast %83 : vector<8x1x64xf32> to vector<8x64xf32>
    %c0_103 = arith.constant 0 : index
    %c5 = arith.constant 5 : index
    %c0_104 = arith.constant 0 : index
    %85 = vector.load %arg12[%c0_103, %c5, %c0_104] : memref<8x16x64xf32, #tpu.memory_space<vmem>>, vector<8x1x64xf32>
    %86 = vector.shape_cast %85 : vector<8x1x64xf32> to vector<8x64xf32>
    %87 = arith.maximumf %84, %86 : vector<8x64xf32>
    %c0_105 = arith.constant 0 : index
    %c128_106 = arith.constant 128 : index
    %88 = vector.load %arg13[%c0_105, %c128_106] : memref<8x512xf32, #tpu.memory_space<vmem>>, vector<8x64xf32>
    tpu.vector_store %arg13[%c0_105, %c128_106], %87 {strides = array<i32>} : memref<8x512xf32, #tpu.memory_space<vmem>>, vector<8x64xf32>,
    %c0_107 = arith.constant 0 : index
    %c6 = arith.constant 6 : index
    %c0_108 = arith.constant 0 : index
    %89 = vector.load %arg12[%c0_107, %c6, %c0_108] : memref<8x16x64xf32, #tpu.memory_space<vmem>>, vector<8x1x64xf32>
    %90 = vector.shape_cast %89 : vector<8x1x64xf32> to vector<8x64xf32>
    %c0_109 = arith.constant 0 : index
    %c7 = arith.constant 7 : index
    %c0_110 = arith.constant 0 : index
    %91 = vector.load %arg12[%c0_109, %c7, %c0_110] : memref<8x16x64xf32, #tpu.memory_space<vmem>>, vector<8x1x64xf32>
    %92 = vector.shape_cast %91 : vector<8x1x64xf32> to vector<8x64xf32>
    %93 = arith.maximumf %90, %92 : vector<8x64xf32>
    %c0_111 = arith.constant 0 : index
    %c192 = arith.constant 192 : index
    %94 = vector.load %arg13[%c0_111, %c192] : memref<8x512xf32, #tpu.memory_space<vmem>>, vector<8x64xf32>
    tpu.vector_store %arg13[%c0_111, %c192], %93 {strides = array<i32>} : memref<8x512xf32, #tpu.memory_space<vmem>>, vector<8x64xf32>,
    %c0_112 = arith.constant 0 : index
    %c8 = arith.constant 8 : index
    %c0_113 = arith.constant 0 : index
    %95 = vector.load %arg12[%c0_112, %c8, %c0_113] : memref<8x16x64xf32, #tpu.memory_space<vmem>>, vector<8x1x64xf32>
    %96 = vector.shape_cast %95 : vector<8x1x64xf32> to vector<8x64xf32>
    %c0_114 = arith.constant 0 : index
    %c9 = arith.constant 9 : index
    %c0_115 = arith.constant 0 : index
    %97 = vector.load %arg12[%c0_114, %c9, %c0_115] : memref<8x16x64xf32, #tpu.memory_space<vmem>>, vector<8x1x64xf32>
    %98 = vector.shape_cast %97 : vector<8x1x64xf32> to vector<8x64xf32>
    %99 = arith.maximumf %96, %98 : vector<8x64xf32>
    %c0_116 = arith.constant 0 : index
    %c256 = arith.constant 256 : index
    %100 = vector.load %arg13[%c0_116, %c256] : memref<8x512xf32, #tpu.memory_space<vmem>>, vector<8x64xf32>
    tpu.vector_store %arg13[%c0_116, %c256], %99 {strides = array<i32>} : memref<8x512xf32, #tpu.memory_space<vmem>>, vector<8x64xf32>,
    %c0_117 = arith.constant 0 : index
    %c10 = arith.constant 10 : index
    %c0_118 = arith.constant 0 : index
    %101 = vector.load %arg12[%c0_117, %c10, %c0_118] : memref<8x16x64xf32, #tpu.memory_space<vmem>>, vector<8x1x64xf32>
    %102 = vector.shape_cast %101 : vector<8x1x64xf32> to vector<8x64xf32>
    %c0_119 = arith.constant 0 : index
    %c11 = arith.constant 11 : index
    %c0_120 = arith.constant 0 : index
    %103 = vector.load %arg12[%c0_119, %c11, %c0_120] : memref<8x16x64xf32, #tpu.memory_space<vmem>>, vector<8x1x64xf32>
    %104 = vector.shape_cast %103 : vector<8x1x64xf32> to vector<8x64xf32>
    %105 = arith.maximumf %102, %104 : vector<8x64xf32>
    %c0_121 = arith.constant 0 : index
    %c320 = arith.constant 320 : index
    %106 = vector.load %arg13[%c0_121, %c320] : memref<8x512xf32, #tpu.memory_space<vmem>>, vector<8x64xf32>
    tpu.vector_store %arg13[%c0_121, %c320], %105 {strides = array<i32>} : memref<8x512xf32, #tpu.memory_space<vmem>>, vector<8x64xf32>,
    %c0_122 = arith.constant 0 : index
    %c12 = arith.constant 12 : index
    %c0_123 = arith.constant 0 : index
    %107 = vector.load %arg12[%c0_122, %c12, %c0_123] : memref<8x16x64xf32, #tpu.memory_space<vmem>>, vector<8x1x64xf32>
    %108 = vector.shape_cast %107 : vector<8x1x64xf32> to vector<8x64xf32>
    %c0_124 = arith.constant 0 : index
    %c13 = arith.constant 13 : index
    %c0_125 = arith.constant 0 : index
    %109 = vector.load %arg12[%c0_124, %c13, %c0_125] : memref<8x16x64xf32, #tpu.memory_space<vmem>>, vector<8x1x64xf32>
    %110 = vector.shape_cast %109 : vector<8x1x64xf32> to vector<8x64xf32>
    %111 = arith.maximumf %108, %110 : vector<8x64xf32>
    %c0_126 = arith.constant 0 : index
    %c384 = arith.constant 384 : index
    %112 = vector.load %arg13[%c0_126, %c384] : memref<8x512xf32, #tpu.memory_space<vmem>>, vector<8x64xf32>
    tpu.vector_store %arg13[%c0_126, %c384], %111 {strides = array<i32>} : memref<8x512xf32, #tpu.memory_space<vmem>>, vector<8x64xf32>,
    %c0_127 = arith.constant 0 : index
    %c14_128 = arith.constant 14 : index
    %c0_129 = arith.constant 0 : index
    %113 = vector.load %arg12[%c0_127, %c14_128, %c0_129] : memref<8x16x64xf32, #tpu.memory_space<vmem>>, vector<8x1x64xf32>
    %114 = vector.shape_cast %113 : vector<8x1x64xf32> to vector<8x64xf32>
    %c0_130 = arith.constant 0 : index
    %c15_131 = arith.constant 15 : index
    %c0_132 = arith.constant 0 : index
    %115 = vector.load %arg12[%c0_130, %c15_131, %c0_132] : memref<8x16x64xf32, #tpu.memory_space<vmem>>, vector<8x1x64xf32>
    %116 = vector.shape_cast %115 : vector<8x1x64xf32> to vector<8x64xf32>
    %117 = arith.maximumf %114, %116 : vector<8x64xf32>
    %c0_133 = arith.constant 0 : index
    %c448 = arith.constant 448 : index
    %118 = vector.load %arg13[%c0_133, %c448] : memref<8x512xf32, #tpu.memory_space<vmem>>, vector<8x64xf32>
    tpu.vector_store %arg13[%c0_133, %c448], %117 {strides = array<i32>} : memref<8x512xf32, #tpu.memory_space<vmem>>, vector<8x64xf32>,
    %c0_134 = arith.constant 0 : index
    %c0_135 = arith.constant 0 : index
    %119 = vector.load %arg13[%c0_134, %c0_135] : memref<8x512xf32, #tpu.memory_space<vmem>>, vector<8x512xf32>
    %c0_136 = arith.constant 0 : index
    %c0_137 = arith.constant 0 : index
    %120 = vector.load %arg6[%c0_136, %c0_137] : memref<512x128xf32, #tpu.memory_space<vmem>>, vector<512x128xf32>
    %cst_138 = arith.constant dense<0.000000e+00> : vector<8x128xf32>
    %121 = tpu.matmul %119, %120, %cst_138 {dimension_numbers = #tpu.dot_dimension_numbers<[1], [0], [0], [1], [0, 0, 1, 1], [], []>} : vector<8x512xf32>, vector<512x128xf32>, vector<8x128xf32> -> vector<8x128xf32>
    %c0_139 = arith.constant 0 : index
    %c0_140 = arith.constant 0 : index
    %122 = vector.load %arg7[%c0_139, %c0_140] : memref<1x128xf32, #tpu.memory_space<vmem>>, vector<1x128xf32>
    %123 = vector.broadcast %122 : vector<1x128xf32> to vector<8x128xf32>
    %124 = arith.addf %121, %123 : vector<8x128xf32>
    %c0_141 = arith.constant 0 : index
    %c0_142 = arith.constant 0 : index
    %125 = vector.load %arg8[%c0_141, %c0_142] : memref<8x128xf32, #tpu.memory_space<vmem>>, vector<8x128xf32>
    tpu.vector_store %arg8[%c0_141, %c0_142], %124 {strides = array<i32>} : memref<8x128xf32, #tpu.memory_space<vmem>>, vector<8x128xf32>,
    return
  }
  func.func @transform_0(%arg0: i32) -> (i32, i32, i32) {
    %c0_i32 = arith.constant 0 : i32
    %c0_i32_0 = arith.constant 0 : i32
    %c0_i32_1 = arith.constant 0 : i32
    return %arg0, %c0_i32, %c0_i32_0 : i32, i32, i32
  }
  func.func @transform_1(%arg0: i32) -> (i32, i32) {
    %c0_i32 = arith.constant 0 : i32
    %c0_i32_0 = arith.constant 0 : i32
    %c0_i32_1 = arith.constant 0 : i32
    return %c0_i32, %c0_i32_0 : i32, i32
  }
  func.func @transform_2(%arg0: i32) -> (i32, i32) {
    %c0_i32 = arith.constant 0 : i32
    %c0_i32_0 = arith.constant 0 : i32
    %c0_i32_1 = arith.constant 0 : i32
    return %c0_i32, %c0_i32_0 : i32, i32
  }
  func.func @transform_3(%arg0: i32) -> (i32, i32) {
    %c0_i32 = arith.constant 0 : i32
    %c0_i32_0 = arith.constant 0 : i32
    %c0_i32_1 = arith.constant 0 : i32
    return %c0_i32, %c0_i32_0 : i32, i32
  }
  func.func @transform_4(%arg0: i32) -> (i32, i32) {
    %c0_i32 = arith.constant 0 : i32
    %c0_i32_0 = arith.constant 0 : i32
    %c0_i32_1 = arith.constant 0 : i32
    return %c0_i32, %c0_i32_0 : i32, i32
  }
  func.func @transform_5(%arg0: i32) -> (i32, i32) {
    %c0_i32 = arith.constant 0 : i32
    %c0_i32_0 = arith.constant 0 : i32
    %c0_i32_1 = arith.constant 0 : i32
    return %c0_i32, %c0_i32_0 : i32, i32
  }
  func.func @transform_6(%arg0: i32) -> (i32, i32) {
    %c0_i32 = arith.constant 0 : i32
    %c0_i32_0 = arith.constant 0 : i32
    %c0_i32_1 = arith.constant 0 : i32
    return %c0_i32, %c0_i32_0 : i32, i32
  }
  func.func @transform_7(%arg0: i32) -> (i32, i32) {
    %c0_i32 = arith.constant 0 : i32
    %c0_i32_0 = arith.constant 0 : i32
    return %arg0, %c0_i32 : i32, i32
  }
}

</mosaic_0001>

<llo_original>
// kernel: tpu_custom_call.1
$region0: #{tpu_custom_call.1}
  #allocation0 [shape = 'u32[]', space=smem, size = 0x4, offset = 0x4, fixed_abs, tag = 'smem constant byte address 0x4 - core index']
  #allocation1 [shape = 'u32[144,128]{1,0:T(1,128)}', space=vmem, size = 0x12000, scoped, tag = 'internal scratch']
  #allocation2 [shape = 'f32[8,20,32]{2,1,0:T(8,128)}', space=vmem, size = 0x18000, scoped, tag = 'scratch operand']
  #allocation3 [shape = 'f32[8,16,32]{2,1,0:T(8,128)}', space=vmem, size = 0x10000, scoped, tag = 'scratch operand']
  #allocation4 [shape = 'f32[8,16,160]{2,1,0:T(8,128)}', space=vmem, size = 0x20000, scoped, tag = 'scratch operand']
  #allocation5 [shape = 'f32[8,16,64]{2,1,0:T(8,128)}', space=vmem, size = 0x10000, scoped, tag = 'scratch operand']
  #allocation6 [shape = 'f32[8,512]{1,0:T(8,128)}', space=vmem, size = 0x4000, scoped, tag = 'scratch operand']
  %s0 = inlined_call_operand.vmem [shape: f32[16,20,1], index: 0, kind: input, shape index: {}]
  %s1 = inlined_call_operand.vmem [shape: f32[5,32], index: 1, kind: input, shape index: {}]
  %s2 = inlined_call_operand.vmem [shape: f32[1,32], index: 2, kind: input, shape index: {}]
  %s3 = inlined_call_operand.vmem [shape: f32[160,64], index: 3, kind: input, shape index: {}]
  %s4 = inlined_call_operand.vmem [shape: f32[1,64], index: 4, kind: input, shape index: {}]
  %s5 = inlined_call_operand.vmem [shape: f32[512,128], index: 5, kind: input, shape index: {}]
  %s6 = inlined_call_operand.vmem [shape: f32[1,128], index: 6, kind: input, shape index: {}]
  %s7 = inlined_call_operand.hbm [shape: f32[16,128], index: 7, kind: output, shape index: {}]
  %s8 = sld [smem:[#allocation0]]
  $region61: #{tpu_custom_call.1} parent=0
    _
  %s10 = ssub.s32 1, %s8
  %s11 = scalar_select 0, %s10, %s8
  $region1: #{tpu_custom_call.1} parent=0
    #allocation7 [shape = 'u8[8192]{0}', space=vmem, size = 0x2000, scoped, tag = 'output window, operand 0']
    #allocation8 [shape = 's32[2]{0}', space=sflag, size = 0x8, scoped, tag = 'scoped memory for tpu_custom_call.1']
    %12 = vsyncpa [#allocation8], 0
    %s13 = scalar_lea.sflag [#allocation8], 1
    %14 = vsyncpa %s13, 0
    loop: start=0, step=1, limit=4
    $region2: #{tpu_custom_call.1} parent=1 // loop_pre_header
      _
    $region3: #{tpu_custom_call.1} parent=1 // loop_header
      %s16 = sphi 0, %s20
      %p17 = scmp.ge.s32.totalorder %s16, 4
      %s26 = sphi 0, %s28
      %s29 = sphi 0, %s26
      %s30 = sphi 0, %s29
      %s46 = sphi 0, %s30
      %s50 = sphi 0, %s50
      %s52 = sphi 0, %s50
      %s53 = sphi 0, %s52
      %s67 = sphi 0, %s53
      %s71 = sphi 0, %s71
      %s73 = sphi 0, %s71
      %s74 = sphi 0, %s73
      %s88 = sphi 0, %s74
      %s92 = sphi 0, %s92
      %s94 = sphi 0, %s92
      %s95 = sphi 0, %s94
      %s109 = sphi 0, %s95
      %s113 = sphi 0, %s113
      %s115 = sphi 0, %s113
      %s116 = sphi 0, %s115
      %s130 = sphi 0, %s116
      %s134 = sphi 0, %s134
      %s136 = sphi 0, %s134
      %s137 = sphi 0, %s136
      %s151 = sphi 0, %s137
      %s155 = sphi 0, %s155
      %s157 = sphi 0, %s155
      %s158 = sphi 0, %s157
      %s172 = sphi 0, %s158
      %s178 = sphi 0, %s180
      %s181 = sphi 0, %s178
      %s182 = sphi 0, %s181
      %s198 = sphi 0, %s182
    $region4: #{tpu_custom_call.1} parent=1 // loop_header_branch
      %19 = sbr.rel (%p17) target = $region8
    $region5: #{tpu_custom_call.1} parent=1 // loop_body
      %s21 = ssub.s32 %s16, 1
      %s22 = ssub.s32 %s16, 2
      %s23 = sadd.s32 %s16, 1
      %s24 = ssub.s32 %s16, %s23
      %p25 = scmp.eq.s32.totalorder %s24, 0
      %s27 = sadd.s32 %s26, 1
      %s28 = scalar_select %p25, %s26, %s27
      %p31 = pneg %p25
      %p32 = scmp.eq.s32.totalorder %s16, 1
      %p33 = por %p31, %p32
      %p34 = scmp.ne.s32.totalorder %s26, %s29
      %p35 = scmp.eq.s32.totalorder %s16, 0
      %p36 = por %p34, %p35
      %p37 = scmp.ne.s32.totalorder %s26, %s29
      %p38 = scmp.eq.s32.totalorder %s21, 1
      %p39 = por %p37, %p38
      %p40 = scmp.ne.s32.totalorder %s29, %s30
      %p41 = scmp.eq.s32.totalorder %s21, 0
      %p42 = por %p40, %p41
      %p43 = scmp.ne.s32.totalorder %s29, %s30
      %p44 = scmp.eq.s32.totalorder %s22, 1
      %p45 = por %p43, %p44
      %p47 = scmp.ne.s32.totalorder %s30, %s46
      %p48 = scmp.eq.s32.totalorder %s22, 0
      %p49 = por %p47, %p48
      %s51 = sadd.s32 %s50, 1
      %p54 = scmp.eq.s32.totalorder %s16, 1
      %p55 = scmp.ne.s32.totalorder %s50, %s52
      %p56 = scmp.eq.s32.totalorder %s16, 0
      %p57 = por %p55, %p56
      %p58 = scmp.ne.s32.totalorder %s50, %s52
      %p59 = scmp.eq.s32.totalorder %s21, 1
      %p60 = por %p58, %p59
      %p61 = scmp.ne.s32.totalorder %s52, %s53
      %p62 = scmp.eq.s32.totalorder %s21, 0
      %p63 = por %p61, %p62
      %p64 = scmp.ne.s32.totalorder %s52, %s53
      %p65 = scmp.eq.s32.totalorder %s22, 1
      %p66 = por %p64, %p65
      %p68 = scmp.ne.s32.totalorder %s53, %s67
      %p69 = scmp.eq.s32.totalorder %s22, 0
      %p70 = por %p68, %p69
      %s72 = sadd.s32 %s71, 1
      %p75 = scmp.eq.s32.totalorder %s16, 1
      %p76 = scmp.ne.s32.totalorder %s71, %s73
      %p77 = scmp.eq.s32.totalorder %s16, 0
      %p78 = por %p76, %p77
      %p79 = scmp.ne.s32.totalorder %s71, %s73
      %p80 = scmp.eq.s32.totalorder %s21, 1
      %p81 = por %p79, %p80
      %p82 = scmp.ne.s32.totalorder %s73, %s74
      %p83 = scmp.eq.s32.totalorder %s21, 0
      %p84 = por %p82, %p83
      %p85 = scmp.ne.s32.totalorder %s73, %s74
      %p86 = scmp.eq.s32.totalorder %s22, 1
      %p87 = por %p85, %p86
      %p89 = scmp.ne.s32.totalorder %s74, %s88
      %p90 = scmp.eq.s32.totalorder %s22, 0
      %p91 = por %p89, %p90
      %s93 = sadd.s32 %s92, 1
      %p96 = scmp.eq.s32.totalorder %s16, 1
      %p97 = scmp.ne.s32.totalorder %s92, %s94
      %p98 = scmp.eq.s32.totalorder %s16, 0
      %p99 = por %p97, %p98
      %p100 = scmp.ne.s32.totalorder %s92, %s94
      %p101 = scmp.eq.s32.totalorder %s21, 1
      %p102 = por %p100, %p101
      %p103 = scmp.ne.s32.totalorder %s94, %s95
      %p104 = scmp.eq.s32.totalorder %s21, 0
      %p105 = por %p103, %p104
      %p106 = scmp.ne.s32.totalorder %s94, %s95
      %p107 = scmp.eq.s32.totalorder %s22, 1
      %p108 = por %p106, %p107
      %p110 = scmp.ne.s32.totalorder %s95, %s109
      %p111 = scmp.eq.s32.totalorder %s22, 0
      %p112 = por %p110, %p111
      %s114 = sadd.s32 %s113, 1
      %p117 = scmp.eq.s32.totalorder %s16, 1
      %p118 = scmp.ne.s32.totalorder %s113, %s115
      %p119 = scmp.eq.s32.totalorder %s16, 0
      %p120 = por %p118, %p119
      %p121 = scmp.ne.s32.totalorder %s113, %s115
      %p122 = scmp.eq.s32.totalorder %s21, 1
      %p123 = por %p121, %p122
      %p124 = scmp.ne.s32.totalorder %s115, %s116
      %p125 = scmp.eq.s32.totalorder %s21, 0
      %p126 = por %p124, %p125
      %p127 = scmp.ne.s32.totalorder %s115, %s116
      %p128 = scmp.eq.s32.totalorder %s22, 1
      %p129 = por %p127, %p128
      %p131 = scmp.ne.s32.totalorder %s116, %s130
      %p132 = scmp.eq.s32.totalorder %s22, 0
      %p133 = por %p131, %p132
      %s135 = sadd.s32 %s134, 1
      %p138 = scmp.eq.s32.totalorder %s16, 1
      %p139 = scmp.ne.s32.totalorder %s134, %s136
      %p140 = scmp.eq.s32.totalorder %s16, 0
      %p141 = por %p139, %p140
      %p142 = scmp.ne.s32.totalorder %s134, %s136
      %p143 = scmp.eq.s32.totalorder %s21, 1
      %p144 = por %p142, %p143
      %p145 = scmp.ne.s32.totalorder %s136, %s137
      %p146 = scmp.eq.s32.totalorder %s21, 0
      %p147 = por %p145, %p146
      %p148 = scmp.ne.s32.totalorder %s136, %s137
      %p149 = scmp.eq.s32.totalorder %s22, 1
      %p150 = por %p148, %p149
      %p152 = scmp.ne.s32.totalorder %s137, %s151
      %p153 = scmp.eq.s32.totalorder %s22, 0
      %p154 = por %p152, %p153
      %s156 = sadd.s32 %s155, 1
      %p159 = scmp.eq.s32.totalorder %s16, 1
      %p160 = scmp.ne.s32.totalorder %s155, %s157
      %p161 = scmp.eq.s32.totalorder %s16, 0
      %p162 = por %p160, %p161
      %p163 = scmp.ne.s32.totalorder %s155, %s157
      %p164 = scmp.eq.s32.totalorder %s21, 1
      %p165 = por %p163, %p164
      %p166 = scmp.ne.s32.totalorder %s157, %s158
      %p167 = scmp.eq.s32.totalorder %s21, 0
      %p168 = por %p166, %p167
      %p169 = scmp.ne.s32.totalorder %s157, %s158
      %p170 = scmp.eq.s32.totalorder %s22, 1
      %p171 = por %p169, %p170
      %p173 = scmp.ne.s32.totalorder %s158, %s172
      %p174 = scmp.eq.s32.totalorder %s22, 0
      %p175 = por %p173, %p174
      %s176 = ssub.s32 %s16, %s23
      %p177 = scmp.eq.s32.totalorder %s176, 0
      %s179 = sadd.s32 %s178, 1
      %s180 = scalar_select %p177, %s178, %s179
      %p183 = pneg %p177
      %p184 = scmp.eq.s32.totalorder %s16, 1
      %p185 = por %p183, %p184
      %p186 = scmp.ne.s32.totalorder %s178, %s181
      %p187 = scmp.eq.s32.totalorder %s16, 0
      %p188 = por %p186, %p187
      %p189 = scmp.ne.s32.totalorder %s178, %s181
      %p190 = scmp.eq.s32.totalorder %s21, 1
      %p191 = por %p189, %p190
      %p192 = scmp.ne.s32.totalorder %s181, %s182
      %p193 = scmp.eq.s32.totalorder %s21, 0
      %p194 = por %p192, %p193
      %p195 = scmp.ne.s32.totalorder %s181, %s182
      %p196 = scmp.eq.s32.totalorder %s22, 1
      %p197 = por %p195, %p196
      %p199 = scmp.ne.s32.totalorder %s182, %s198
      %p200 = scmp.eq.s32.totalorder %s22, 0
      %p201 = por %p199, %p200
      %p202 = scmp.le.s32.totalorder 1, %s16
      %p203 = scmp.lt.s32.totalorder %s16, 3
      %p204 = pnand %p202, %p203
      %p205 = pneg %p204
      // Predicated region
      $region9: #{tpu_custom_call.1} parent=5 // pred_check
        _
      $region10: #{tpu_custom_call.1} parent=5 // pred_check_branch
        %207 = sbr.rel (%p204) target = $region12
      $region11: #{tpu_custom_call.1} parent=5 // pred_region
        %s208 = ssub.s32 %s16, 1
        // Predicated region
        $region13: #{tpu_custom_call.1} parent=11 // pred_check
          %p209 = pneg %p63
        $region14: #{tpu_custom_call.1} parent=11 // pred_check_branch
          %211 = sbr.rel (%p209) target = $region16
        $region15: #{tpu_custom_call.1} parent=11 // pred_region
          _
        $region16: #{tpu_custom_call.1} parent=11 // pred_fallthru
          _
        // Predicated region
        $region17: #{tpu_custom_call.1} parent=11 // pred_check
          %p212 = pneg %p84
        $region18: #{tpu_custom_call.1} parent=11 // pred_check_branch
          %214 = sbr.rel (%p212) target = $region20
        $region19: #{tpu_custom_call.1} parent=11 // pred_region
          _
        $region20: #{tpu_custom_call.1} parent=11 // pred_fallthru
          _
        // Predicated region
        $region21: #{tpu_custom_call.1} parent=11 // pred_check
          %p215 = pneg %p105
        $region22: #{tpu_custom_call.1} parent=11 // pred_check_branch
          %217 = sbr.rel (%p215) target = $region24
        $region23: #{tpu_custom_call.1} parent=11 // pred_region
          _
        $region24: #{tpu_custom_call.1} parent=11 // pred_fallthru
          _
        // Predicated region
        $region25: #{tpu_custom_call.1} parent=11 // pred_check
          %p218 = pneg %p126
        $region26: #{tpu_custom_call.1} parent=11 // pred_check_branch
          %220 = sbr.rel (%p218) target = $region28
        $region27: #{tpu_custom_call.1} parent=11 // pred_region
          _
        $region28: #{tpu_custom_call.1} parent=11 // pred_fallthru
          _
        // Predicated region
        $region29: #{tpu_custom_call.1} parent=11 // pred_check
          %p221 = pneg %p147
        $region30: #{tpu_custom_call.1} parent=11 // pred_check_branch
          %223 = sbr.rel (%p221) target = $region32
        $region31: #{tpu_custom_call.1} parent=11 // pred_region
          _
        $region32: #{tpu_custom_call.1} parent=11 // pred_fallthru
          _
        // Predicated region
        $region33: #{tpu_custom_call.1} parent=11 // pred_check
          %p224 = pneg %p168
        $region34: #{tpu_custom_call.1} parent=11 // pred_check_branch
          %226 = sbr.rel (%p224) target = $region36
        $region35: #{tpu_custom_call.1} parent=11 // pred_region
          _
        $region36: #{tpu_custom_call.1} parent=11 // pred_fallthru
          _
      $region12: #{tpu_custom_call.1} parent=5 // pred_fallthru
        _
      %p227 = scmp.lt.s32.totalorder %s16, 2
      // Predicated region
      $region37: #{tpu_custom_call.1} parent=5 // pred_check
        %p228 = pneg %p227
      $region38: #{tpu_custom_call.1} parent=5 // pred_check_branch
        %230 = sbr.rel (%p228) target = $region40
      $region39: #{tpu_custom_call.1} parent=5 // pred_region
        // Predicated region
        $region41: #{tpu_custom_call.1} parent=39 // pred_check
          %p231 = pneg %p36
        $region42: #{tpu_custom_call.1} parent=39 // pred_check_branch
          %233 = sbr.rel (%p231) target = $region44
        $region43: #{tpu_custom_call.1} parent=39 // pred_region
          %s234 = smul.u32 8, %s16
          %p235 = scmp.lt.s32.totalorder %s234, 15
          %s236 = scalar_select %p235, %s234, 15
          %s237 = smul.addr %s236, 3
          %s238 = smul.addr %s237, 8
          %s239 = scalar_lea.vmem %s0, %s238
          %s240 = smul.u32 8, %s16
        $region44: #{tpu_custom_call.1} parent=39 // pred_fallthru
          _
      $region40: #{tpu_custom_call.1} parent=5 // pred_fallthru
        _
      %p241 = scmp.le.s32.totalorder 1, %s16
      %p242 = scmp.lt.s32.totalorder %s16, 3
      %p243 = pnand %p241, %p242
      %p244 = pneg %p243
      // Predicated region
      $region45: #{tpu_custom_call.1} parent=5 // pred_check
        _
      $region46: #{tpu_custom_call.1} parent=5 // pred_check_branch
        %246 = sbr.rel (%p243) target = $region48
      $region47: #{tpu_custom_call.1} parent=5 // pred_region
        %s247 = ssub.s32 %s16, 1
        %s248 = smul.u32 8, %s21
        %p249 = scmp.lt.s32.totalorder %s248, 15
        %s250 = scalar_select %p249, %s248, 15
        %s251 = smul.addr %s250, 3
        %s252 = smul.addr %s251, 8
        %s253 = scalar_lea.vmem %s0, %s252
        %p254 = pneg %p42
        %p255 = pneg %p39
        %p256 = pneg %p63
        %p257 = pneg %p60
        %p258 = pneg %p84
        %p259 = pneg %p81
        %p260 = pneg %p105
        %p261 = pneg %p102
        %p262 = pneg %p126
        %p263 = pneg %p123
        %p264 = pneg %p147
        %p265 = pneg %p144
        %p266 = pneg %p168
        %p267 = pneg %p165
        %p268 = pneg %p194
        %p269 = pneg %p191
        %s270 = sand.u32 %s181, 1
        %s271 = scalar_lea.sflag [#allocation8], %s270
        %s272 = sand.u32 %s181, 1
        %s273 = smul.addr %s272, 8
        %s274 = scalar_lea.vmem [#allocation7], %s273
        %s275 = smul.u32 8, %s21
        %p276 = scmp.lt.s32.totalorder %s275, 15
        %s277 = scalar_select %p276, %s275, 15
        %s278 = smul.addr %s277, 3
        %s279 = smul.addr %s278, 8
        %s280 = scalar_lea.vmem %s0, %s279
        %s281 = smul.u32 8, %s21
        %v282 = vld [vmem:[%s280] sm:$0xff]
        %v283 = vld [vmem:[%s280 + $0x8] sm:$0xff]
        %v284 = vld [vmem:[%s280 + $0x10] sm:$0xf]
        %v285 = vld [vmem:[%s280 + $0x18] sm:$0xff]
        %v286 = vld [vmem:[%s280 + $0x20] sm:$0xff]
        %v287 = vld [vmem:[%s280 + $0x28] sm:$0xf]
        %v288 = vld [vmem:[%s280 + $0x30] sm:$0xff]
        %v289 = vld [vmem:[%s280 + $0x38] sm:$0xff]
        %v290 = vld [vmem:[%s280 + $0x40] sm:$0xf]
        %v291 = vld [vmem:[%s280 + $0x48] sm:$0xff]
        %v292 = vld [vmem:[%s280 + $0x50] sm:$0xff]
        %v293 = vld [vmem:[%s280 + $0x58] sm:$0xf]
        %v294 = vld [vmem:[%s280 + $0x60] sm:$0xff]
        %v295 = vld [vmem:[%s280 + $0x68] sm:$0xff]
        %v296 = vld [vmem:[%s280 + $0x70] sm:$0xf]
        %v297 = vld [vmem:[%s280 + $0x78] sm:$0xff]
        %v298 = vld [vmem:[%s280 + $0x80] sm:$0xff]
        %v299 = vld [vmem:[%s280 + $0x88] sm:$0xf]
        %v300 = vld [vmem:[%s280 + $0x90] sm:$0xff]
        %v301 = vld [vmem:[%s280 + $0x98] sm:$0xff]
        %v302 = vld [vmem:[%s280 + $0xa0] sm:$0xf]
        %v303 = vld [vmem:[%s280 + $0xa8] sm:$0xff]
        %v304 = vld [vmem:[%s280 + $0xb0] sm:$0xff]
        %v305 = vld [vmem:[%s280 + $0xb8] sm:$0xf]
        %307 = vset.pattern.permute.xlu0 0
        %308 = vperm.xlu0 %307, %v282
        %v309 = vpop.permute.xlu0 %308
        %312 = vset.pattern.permute.xlu0 0
        %313 = vperm.xlu0 %312, %v283
        %v314 = vpop.permute.xlu0 %313
        %317 = vset.pattern.permute.xlu0 0
        %318 = vperm.xlu0 %317, %v284
        %v319 = vpop.permute.xlu0 %318
        %322 = vset.pattern.permute.xlu0 0
        %323 = vperm.xlu0 %322, %v285
        %v324 = vpop.permute.xlu0 %323
        %327 = vset.pattern.permute.xlu0 0
        %328 = vperm.xlu0 %327, %v286
        %v329 = vpop.permute.xlu0 %328
        %332 = vset.pattern.permute.xlu0 0
        %333 = vperm.xlu0 %332, %v287
        %v334 = vpop.permute.xlu0 %333
        %337 = vset.pattern.permute.xlu0 0
        %338 = vperm.xlu0 %337, %v288
        %v339 = vpop.permute.xlu0 %338
        %342 = vset.pattern.permute.xlu0 0
        %343 = vperm.xlu0 %342, %v289
        %v344 = vpop.permute.xlu0 %343
        %347 = vset.pattern.permute.xlu0 0
        %348 = vperm.xlu0 %347, %v290
        %v349 = vpop.permute.xlu0 %348
        %352 = vset.pattern.permute.xlu0 0
        %353 = vperm.xlu0 %352, %v291
        %v354 = vpop.permute.xlu0 %353
        %357 = vset.pattern.permute.xlu0 0
        %358 = vperm.xlu0 %357, %v292
        %v359 = vpop.permute.xlu0 %358
        %362 = vset.pattern.permute.xlu0 0
        %363 = vperm.xlu0 %362, %v293
        %v364 = vpop.permute.xlu0 %363
        %367 = vset.pattern.permute.xlu0 0
        %368 = vperm.xlu0 %367, %v294
        %v369 = vpop.permute.xlu0 %368
        %372 = vset.pattern.permute.xlu0 0
        %373 = vperm.xlu0 %372, %v295
        %v374 = vpop.permute.xlu0 %373
        %377 = vset.pattern.permute.xlu0 0
        %378 = vperm.xlu0 %377, %v296
        %v379 = vpop.permute.xlu0 %378
        %382 = vset.pattern.permute.xlu0 0
        %383 = vperm.xlu0 %382, %v297
        %v384 = vpop.permute.xlu0 %383
        %387 = vset.pattern.permute.xlu0 0
        %388 = vperm.xlu0 %387, %v298
        %v389 = vpop.permute.xlu0 %388
        %392 = vset.pattern.permute.xlu0 0
        %393 = vperm.xlu0 %392, %v299
        %v394 = vpop.permute.xlu0 %393
        %397 = vset.pattern.permute.xlu0 0
        %398 = vperm.xlu0 %397, %v300
        %v399 = vpop.permute.xlu0 %398
        %402 = vset.pattern.permute.xlu0 0
        %403 = vperm.xlu0 %402, %v301
        %v404 = vpop.permute.xlu0 %403
        %407 = vset.pattern.permute.xlu0 0
        %408 = vperm.xlu0 %407, %v302
        %v409 = vpop.permute.xlu0 %408
        %412 = vset.pattern.permute.xlu0 0
        %413 = vperm.xlu0 %412, %v303
        %v414 = vpop.permute.xlu0 %413
        %417 = vset.pattern.permute.xlu0 0
        %418 = vperm.xlu0 %417, %v304
        %v419 = vpop.permute.xlu0 %418
        %422 = vset.pattern.permute.xlu0 0
        %423 = vperm.xlu0 %422, %v305
        %v424 = vpop.permute.xlu0 %423
        %vm426 = vcmask 261120
        %427 = vst.msk [vmem:[#allocation2] sm:$0xff] %vm426, %v309
        %428 = vst.msk [vmem:[#allocation2 + $0x8] sm:$0xff] %vm426, %v314
        %vm429 = vcmask 257024
        %430 = vst.msk [vmem:[#allocation2 + $0x10] sm:$0xf] %vm429, %v319
        %431 = vst.msk [vmem:[#allocation2 + $0x18] sm:$0xff] %vm426, %v324
        %432 = vst.msk [vmem:[#allocation2 + $0x20] sm:$0xff] %vm426, %v329
        %433 = vst.msk [vmem:[#allocation2 + $0x28] sm:$0xf] %vm429, %v334
        %434 = vst.msk [vmem:[#allocation2 + $0x30] sm:$0xff] %vm426, %v339
        %435 = vst.msk [vmem:[#allocation2 + $0x38] sm:$0xff] %vm426, %v344
        %436 = vst.msk [vmem:[#allocation2 + $0x40] sm:$0xf] %vm429, %v349
        %437 = vst.msk [vmem:[#allocation2 + $0x48] sm:$0xff] %vm426, %v354
        %438 = vst.msk [vmem:[#allocation2 + $0x50] sm:$0xff] %vm426, %v359
        %439 = vst.msk [vmem:[#allocation2 + $0x58] sm:$0xf] %vm429, %v364
        %440 = vst.msk [vmem:[#allocation2 + $0x60] sm:$0xff] %vm426, %v369
        %441 = vst.msk [vmem:[#allocation2 + $0x68] sm:$0xff] %vm426, %v374
        %442 = vst.msk [vmem:[#allocation2 + $0x70] sm:$0xf] %vm429, %v379
        %443 = vst.msk [vmem:[#allocation2 + $0x78] sm:$0xff] %vm426, %v384
        %444 = vst.msk [vmem:[#allocation2 + $0x80] sm:$0xff] %vm426, %v389
        %445 = vst.msk [vmem:[#allocation2 + $0x88] sm:$0xf] %vm429, %v394
        %446 = vst.msk [vmem:[#allocation2 + $0x90] sm:$0xff] %vm426, %v399
        %447 = vst.msk [vmem:[#allocation2 + $0x98] sm:$0xff] %vm426, %v404
        %448 = vst.msk [vmem:[#allocation2 + $0xa0] sm:$0xf] %vm429, %v409
        %449 = vst.msk [vmem:[#allocation2 + $0xa8] sm:$0xff] %vm426, %v414
        %450 = vst.msk [vmem:[#allocation2 + $0xb0] sm:$0xff] %vm426, %v419
        %451 = vst.msk [vmem:[#allocation2 + $0xb8] sm:$0xf] %vm429, %v424
        %v452 = vld [vmem:[%s2] sm:$0x1]
        %v454 = vlaneseq
        %v455 = vshrl.u32 %v454, 7
        %v456 = vsub.s32 0, %v455
        %v457 = vrot.slane %v452, %v456
        %v459 = vadd.f32 %v457, 0.0
        %v460 = vld [vmem:[#allocation2] sm:$0xff]
        %v461 = vld [vmem:[#allocation2 + $0x8] sm:$0xff]
        %v462 = vld [vmem:[#allocation2 + $0x18] sm:$0xff]
        %v463 = vld [vmem:[#allocation2 + $0x20] sm:$0xff]
        %v464 = vld [vmem:[#allocation2 + $0x30] sm:$0xff]
        %v465 = vld [vmem:[#allocation2 + $0x38] sm:$0xff]
        %v466 = vld [vmem:[#allocation2 + $0x48] sm:$0xff]
        %v467 = vld [vmem:[#allocation2 + $0x50] sm:$0xff]
        %v468 = vld [vmem:[#allocation2 + $0x60] sm:$0xff]
        %v469 = vld [vmem:[#allocation2 + $0x68] sm:$0xff]
        %v470 = vld [vmem:[#allocation2 + $0x78] sm:$0xff]
        %v471 = vld [vmem:[#allocation2 + $0x80] sm:$0xff]
        %v472 = vld [vmem:[#allocation2 + $0x90] sm:$0xff]
        %v473 = vld [vmem:[#allocation2 + $0x98] sm:$0xff]
        %v474 = vld [vmem:[#allocation2 + $0xa8] sm:$0xff]
        %v475 = vld [vmem:[#allocation2 + $0xb0] sm:$0xff]
        %v476 = vld [vmem:[%s1] sm:$0x1]
        %v477 = vlaneseq
        %v478 = vshrl.u32 %v477, 7
        %v479 = vsub.s32 0, %v478
        %v480 = vrot.slane %v476, %v479
        %v481 = vmul.f32 %v460, %v480
        %v482 = vmul.f32 %v461, %v480
        %v483 = vmul.f32 %v462, %v480
        %v484 = vmul.f32 %v463, %v480
        %v485 = vmul.f32 %v464, %v480
        %v486 = vmul.f32 %v465, %v480
        %v487 = vmul.f32 %v466, %v480
        %v488 = vmul.f32 %v467, %v480
        %v489 = vmul.f32 %v468, %v480
        %v490 = vmul.f32 %v469, %v480
        %v491 = vmul.f32 %v470, %v480
        %v492 = vmul.f32 %v471, %v480
        %v493 = vmul.f32 %v472, %v480
        %v494 = vmul.f32 %v473, %v480
        %v495 = vmul.f32 %v474, %v480
        %v496 = vmul.f32 %v475, %v480
        %v497 = vadd.f32 %v459, %v481
        %v498 = vadd.f32 %v459, %v482
        %v499 = vadd.f32 %v459, %v483
        %v500 = vadd.f32 %v459, %v484
        %v501 = vadd.f32 %v459, %v485
        %v502 = vadd.f32 %v459, %v486
        %v503 = vadd.f32 %v459, %v487
        %v504 = vadd.f32 %v459, %v488
        %v505 = vadd.f32 %v459, %v489
        %v506 = vadd.f32 %v459, %v490
        %v507 = vadd.f32 %v459, %v491
        %v508 = vadd.f32 %v459, %v492
        %v509 = vadd.f32 %v459, %v493
        %v510 = vadd.f32 %v459, %v494
        %v511 = vadd.f32 %v459, %v495
        %v512 = vadd.f32 %v459, %v496
        %v513 = vld [vmem:[#allocation2 + $0x1] sm:$0xff]
        %v514 = vld [vmem:[#allocation2 + $0x9] sm:$0xff]
        %v515 = vld [vmem:[#allocation2 + $0x19] sm:$0xff]
        %v516 = vld [vmem:[#allocation2 + $0x21] sm:$0xff]
        %v517 = vld [vmem:[#allocation2 + $0x31] sm:$0xff]
        %v518 = vld [vmem:[#allocation2 + $0x39] sm:$0xff]
        %v519 = vld [vmem:[#allocation2 + $0x49] sm:$0xff]
        %v520 = vld [vmem:[#allocation2 + $0x51] sm:$0xff]
        %v521 = vld [vmem:[#allocation2 + $0x61] sm:$0xff]
        %v522 = vld [vmem:[#allocation2 + $0x69] sm:$0xff]
        %v523 = vld [vmem:[#allocation2 + $0x79] sm:$0xff]
        %v524 = vld [vmem:[#allocation2 + $0x81] sm:$0xff]
        %v525 = vld [vmem:[#allocation2 + $0x91] sm:$0xff]
        %v526 = vld [vmem:[#allocation2 + $0x99] sm:$0xff]
        %v527 = vld [vmem:[#allocation2 + $0xa9] sm:$0xff]
        %v528 = vld [vmem:[#allocation2 + $0xb1] sm:$0xff]
        %v529 = vld [vmem:[%s1 + $0x1] sm:$0x1]
        %v530 = vlaneseq
        %v531 = vshrl.u32 %v530, 7
        %v532 = vsub.s32 0, %v531
        %v533 = vrot.slane %v529, %v532
        %v534 = vmul.f32 %v513, %v533
        %v535 = vmul.f32 %v514, %v533
        %v536 = vmul.f32 %v515, %v533
        %v537 = vmul.f32 %v516, %v533
        %v538 = vmul.f32 %v517, %v533
        %v539 = vmul.f32 %v518, %v533
        %v540 = vmul.f32 %v519, %v533
        %v541 = vmul.f32 %v520, %v533
        %v542 = vmul.f32 %v521, %v533
        %v543 = vmul.f32 %v522, %v533
        %v544 = vmul.f32 %v523, %v533
        %v545 = vmul.f32 %v524, %v533
        %v546 = vmul.f32 %v525, %v533
        %v547 = vmul.f32 %v526, %v533
        %v548 = vmul.f32 %v527, %v533
        %v549 = vmul.f32 %v528, %v533
        %v550 = vadd.f32 %v497, %v534
        %v551 = vadd.f32 %v498, %v535
        %v552 = vadd.f32 %v499, %v536
        %v553 = vadd.f32 %v500, %v537
        %v554 = vadd.f32 %v501, %v538
        %v555 = vadd.f32 %v502, %v539
        %v556 = vadd.f32 %v503, %v540
        %v557 = vadd.f32 %v504, %v541
        %v558 = vadd.f32 %v505, %v542
        %v559 = vadd.f32 %v506, %v543
        %v560 = vadd.f32 %v507, %v544
        %v561 = vadd.f32 %v508, %v545
        %v562 = vadd.f32 %v509, %v546
        %v563 = vadd.f32 %v510, %v547
        %v564 = vadd.f32 %v511, %v548
        %v565 = vadd.f32 %v512, %v549
        %v566 = vld [vmem:[#allocation2 + $0x2] sm:$0xff]
        %v567 = vld [vmem:[#allocation2 + $0xa] sm:$0xff]
        %v568 = vld [vmem:[#allocation2 + $0x1a] sm:$0xff]
        %v569 = vld [vmem:[#allocation2 + $0x22] sm:$0xff]
        %v570 = vld [vmem:[#allocation2 + $0x32] sm:$0xff]
        %v571 = vld [vmem:[#allocation2 + $0x3a] sm:$0xff]
        %v572 = vld [vmem:[#allocation2 + $0x4a] sm:$0xff]
        %v573 = vld [vmem:[#allocation2 + $0x52] sm:$0xff]
        %v574 = vld [vmem:[#allocation2 + $0x62] sm:$0xff]
        %v575 = vld [vmem:[#allocation2 + $0x6a] sm:$0xff]
        %v576 = vld [vmem:[#allocation2 + $0x7a] sm:$0xff]
        %v577 = vld [vmem:[#allocation2 + $0x82] sm:$0xff]
        %v578 = vld [vmem:[#allocation2 + $0x92] sm:$0xff]
        %v579 = vld [vmem:[#allocation2 + $0x9a] sm:$0xff]
        %v580 = vld [vmem:[#allocation2 + $0xaa] sm:$0xff]
        %v581 = vld [vmem:[#allocation2 + $0xb2] sm:$0xff]
        %v582 = vld [vmem:[%s1 + $0x2] sm:$0x1]
        %v583 = vlaneseq
        %v584 = vshrl.u32 %v583, 7
        %v585 = vsub.s32 0, %v584
        %v586 = vrot.slane %v582, %v585
        %v587 = vmul.f32 %v566, %v586
        %v588 = vmul.f32 %v567, %v586
        %v589 = vmul.f32 %v568, %v586
        %v590 = vmul.f32 %v569, %v586
        %v591 = vmul.f32 %v570, %v586
        %v592 = vmul.f32 %v571, %v586
        %v593 = vmul.f32 %v572, %v586
        %v594 = vmul.f32 %v573, %v586
        %v595 = vmul.f32 %v574, %v586
        %v596 = vmul.f32 %v575, %v586
        %v597 = vmul.f32 %v576, %v586
        %v598 = vmul.f32 %v577, %v586
        %v599 = vmul.f32 %v578, %v586
        %v600 = vmul.f32 %v579, %v586
        %v601 = vmul.f32 %v580, %v586
        %v602 = vmul.f32 %v581, %v586
        %v603 = vadd.f32 %v550, %v587
        %v604 = vadd.f32 %v551, %v588
        %v605 = vadd.f32 %v552, %v589
        %v606 = vadd.f32 %v553, %v590
        %v607 = vadd.f32 %v554, %v591
        %v608 = vadd.f32 %v555, %v592
        %v609 = vadd.f32 %v556, %v593
        %v610 = vadd.f32 %v557, %v594
        %v611 = vadd.f32 %v558, %v595
        %v612 = vadd.f32 %v559, %v596
        %v613 = vadd.f32 %v560, %v597
        %v614 = vadd.f32 %v561, %v598
        %v615 = vadd.f32 %v562, %v599
        %v616 = vadd.f32 %v563, %v600
        %v617 = vadd.f32 %v564, %v601
        %v618 = vadd.f32 %v565, %v602
        %v619 = vld [vmem:[#allocation2 + $0x3] sm:$0xff]
        %v620 = vld [vmem:[#allocation2 + $0xb] sm:$0xff]
        %v621 = vld [vmem:[#allocation2 + $0x1b] sm:$0xff]
        %v622 = vld [vmem:[#allocation2 + $0x23] sm:$0xff]
        %v623 = vld [vmem:[#allocation2 + $0x33] sm:$0xff]
        %v624 = vld [vmem:[#allocation2 + $0x3b] sm:$0xff]
        %v625 = vld [vmem:[#allocation2 + $0x4b] sm:$0xff]
        %v626 = vld [vmem:[#allocation2 + $0x53] sm:$0xff]
        %v627 = vld [vmem:[#allocation2 + $0x63] sm:$0xff]
        %v628 = vld [vmem:[#allocation2 + $0x6b] sm:$0xff]
        %v629 = vld [vmem:[#allocation2 + $0x7b] sm:$0xff]
        %v630 = vld [vmem:[#allocation2 + $0x83] sm:$0xff]
        %v631 = vld [vmem:[#allocation2 + $0x93] sm:$0xff]
        %v632 = vld [vmem:[#allocation2 + $0x9b] sm:$0xff]
        %v633 = vld [vmem:[#allocation2 + $0xab] sm:$0xff]
        %v634 = vld [vmem:[#allocation2 + $0xb3] sm:$0xff]
        %v635 = vld [vmem:[%s1 + $0x3] sm:$0x1]
        %v636 = vlaneseq
        %v637 = vshrl.u32 %v636, 7
        %v638 = vsub.s32 0, %v637
        %v639 = vrot.slane %v635, %v638
        %v640 = vmul.f32 %v619, %v639
        %v641 = vmul.f32 %v620, %v639
        %v642 = vmul.f32 %v621, %v639
        %v643 = vmul.f32 %v622, %v639
        %v644 = vmul.f32 %v623, %v639
        %v645 = vmul.f32 %v624, %v639
        %v646 = vmul.f32 %v625, %v639
        %v647 = vmul.f32 %v626, %v639
        %v648 = vmul.f32 %v627, %v639
        %v649 = vmul.f32 %v628, %v639
        %v650 = vmul.f32 %v629, %v639
        %v651 = vmul.f32 %v630, %v639
        %v652 = vmul.f32 %v631, %v639
        %v653 = vmul.f32 %v632, %v639
        %v654 = vmul.f32 %v633, %v639
        %v655 = vmul.f32 %v634, %v639
        %v656 = vadd.f32 %v603, %v640
        %v657 = vadd.f32 %v604, %v641
        %v658 = vadd.f32 %v605, %v642
        %v659 = vadd.f32 %v606, %v643
        %v660 = vadd.f32 %v607, %v644
        %v661 = vadd.f32 %v608, %v645
        %v662 = vadd.f32 %v609, %v646
        %v663 = vadd.f32 %v610, %v647
        %v664 = vadd.f32 %v611, %v648
        %v665 = vadd.f32 %v612, %v649
        %v666 = vadd.f32 %v613, %v650
        %v667 = vadd.f32 %v614, %v651
        %v668 = vadd.f32 %v615, %v652
        %v669 = vadd.f32 %v616, %v653
        %v670 = vadd.f32 %v617, %v654
        %v671 = vadd.f32 %v618, %v655
        %v672 = vld [vmem:[#allocation2 + $0x4] sm:$0xff]
        %v673 = vld [vmem:[#allocation2 + $0xc] sm:$0xff]
        %v674 = vld [vmem:[#allocation2 + $0x1c] sm:$0xff]
        %v675 = vld [vmem:[#allocation2 + $0x24] sm:$0xff]
        %v676 = vld [vmem:[#allocation2 + $0x34] sm:$0xff]
        %v677 = vld [vmem:[#allocation2 + $0x3c] sm:$0xff]
        %v678 = vld [vmem:[#allocation2 + $0x4c] sm:$0xff]
        %v679 = vld [vmem:[#allocation2 + $0x54] sm:$0xff]
        %v680 = vld [vmem:[#allocation2 + $0x64] sm:$0xff]
        %v681 = vld [vmem:[#allocation2 + $0x6c] sm:$0xff]
        %v682 = vld [vmem:[#allocation2 + $0x7c] sm:$0xff]
        %v683 = vld [vmem:[#allocation2 + $0x84] sm:$0xff]
        %v684 = vld [vmem:[#allocation2 + $0x94] sm:$0xff]
        %v685 = vld [vmem:[#allocation2 + $0x9c] sm:$0xff]
        %v686 = vld [vmem:[#allocation2 + $0xac] sm:$0xff]
        %v687 = vld [vmem:[#allocation2 + $0xb4] sm:$0xff]
        %v688 = vld [vmem:[%s1 + $0x4] sm:$0x1]
        %v689 = vlaneseq
        %v690 = vshrl.u32 %v689, 7
        %v691 = vsub.s32 0, %v690
        %v692 = vrot.slane %v688, %v691
        %v693 = vmul.f32 %v672, %v692
        %v694 = vmul.f32 %v673, %v692
        %v695 = vmul.f32 %v674, %v692
        %v696 = vmul.f32 %v675, %v692
        %v697 = vmul.f32 %v676, %v692
        %v698 = vmul.f32 %v677, %v692
        %v699 = vmul.f32 %v678, %v692
        %v700 = vmul.f32 %v679, %v692
        %v701 = vmul.f32 %v680, %v692
        %v702 = vmul.f32 %v681, %v692
        %v703 = vmul.f32 %v682, %v692
        %v704 = vmul.f32 %v683, %v692
        %v705 = vmul.f32 %v684, %v692
        %v706 = vmul.f32 %v685, %v692
        %v707 = vmul.f32 %v686, %v692
        %v708 = vmul.f32 %v687, %v692
        %v709 = vadd.f32 %v656, %v693
        %v710 = vadd.f32 %v657, %v694
        %v711 = vadd.f32 %v658, %v695
        %v712 = vadd.f32 %v659, %v696
        %v713 = vadd.f32 %v660, %v697
        %v714 = vadd.f32 %v661, %v698
        %v715 = vadd.f32 %v662, %v699
        %v716 = vadd.f32 %v663, %v700
        %v717 = vadd.f32 %v664, %v701
        %v718 = vadd.f32 %v665, %v702
        %v719 = vadd.f32 %v666, %v703
        %v720 = vadd.f32 %v667, %v704
        %v721 = vadd.f32 %v668, %v705
        %v722 = vadd.f32 %v669, %v706
        %v723 = vadd.f32 %v670, %v707
        %v724 = vadd.f32 %v671, %v708
        %v725 = vmax.f32 %v709, 0.0
        %v726 = vmax.f32 %v710, 0.0
        %v727 = vmax.f32 %v711, 0.0
        %v728 = vmax.f32 %v712, 0.0
        %v729 = vmax.f32 %v713, 0.0
        %v730 = vmax.f32 %v714, 0.0
        %v731 = vmax.f32 %v715, 0.0
        %v732 = vmax.f32 %v716, 0.0
        %v733 = vmax.f32 %v717, 0.0
        %v734 = vmax.f32 %v718, 0.0
        %v735 = vmax.f32 %v719, 0.0
        %v736 = vmax.f32 %v720, 0.0
        %v737 = vmax.f32 %v721, 0.0
        %v738 = vmax.f32 %v722, 0.0
        %v739 = vmax.f32 %v723, 0.0
        %v740 = vmax.f32 %v724, 0.0
        %741 = vst.msk [vmem:[#allocation3] sm:$0xff] %vm426, %v725
        %742 = vst.msk [vmem:[#allocation3 + $0x8] sm:$0xff] %vm426, %v726
        %743 = vst.msk [vmem:[#allocation3 + $0x10] sm:$0xff] %vm426, %v727
        %744 = vst.msk [vmem:[#allocation3 + $0x18] sm:$0xff] %vm426, %v728
        %745 = vst.msk [vmem:[#allocation3 + $0x20] sm:$0xff] %vm426, %v729
        %746 = vst.msk [vmem:[#allocation3 + $0x28] sm:$0xff] %vm426, %v730
        %747 = vst.msk [vmem:[#allocation3 + $0x30] sm:$0xff] %vm426, %v731
        %748 = vst.msk [vmem:[#allocation3 + $0x38] sm:$0xff] %vm426, %v732
        %749 = vst.msk [vmem:[#allocation3 + $0x40] sm:$0xff] %vm426, %v733
        %750 = vst.msk [vmem:[#allocation3 + $0x48] sm:$0xff] %vm426, %v734
        %751 = vst.msk [vmem:[#allocation3 + $0x50] sm:$0xff] %vm426, %v735
        %752 = vst.msk [vmem:[#allocation3 + $0x58] sm:$0xff] %vm426, %v736
        %753 = vst.msk [vmem:[#allocation3 + $0x60] sm:$0xff] %vm426, %v737
        %754 = vst.msk [vmem:[#allocation3 + $0x68] sm:$0xff] %vm426, %v738
        %755 = vst.msk [vmem:[#allocation3 + $0x70] sm:$0xff] %vm426, %v739
        %756 = vst.msk [vmem:[#allocation3 + $0x78] sm:$0xff] %vm426, %v740
        %vm757 = vcmask 254976
        %758 = vst.msk [vmem:[#allocation4] sm:$0x3] %vm757, 0.0
        %759 = vst.msk [vmem:[#allocation4 + $0x20] sm:$0x3] %vm757, 0.0
        %760 = vst.msk [vmem:[#allocation4 + $0x40] sm:$0x3] %vm757, 0.0
        %761 = vst.msk [vmem:[#allocation4 + $0x60] sm:$0x3] %vm757, 0.0
        %762 = vst.msk [vmem:[#allocation4 + $0x80] sm:$0x3] %vm757, 0.0
        %763 = vst.msk [vmem:[#allocation4 + $0xa0] sm:$0x3] %vm757, 0.0
        %764 = vst.msk [vmem:[#allocation4 + $0xc0] sm:$0x3] %vm757, 0.0
        %765 = vst.msk [vmem:[#allocation4 + $0xe0] sm:$0x3] %vm757, 0.0
        %v766 = vld [vmem:[#allocation3] sm:$0xff]
        %v767 = vld [vmem:[#allocation3 + $0x8] sm:$0x3f]
        %v768 = vld [vmem:[#allocation3 + $0x10] sm:$0xff]
        %v769 = vld [vmem:[#allocation3 + $0x18] sm:$0x3f]
        %v770 = vld [vmem:[#allocation3 + $0x20] sm:$0xff]
        %v771 = vld [vmem:[#allocation3 + $0x28] sm:$0x3f]
        %v772 = vld [vmem:[#allocation3 + $0x30] sm:$0xff]
        %v773 = vld [vmem:[#allocation3 + $0x38] sm:$0x3f]
        %v774 = vld [vmem:[#allocation3 + $0x40] sm:$0xff]
        %v775 = vld [vmem:[#allocation3 + $0x48] sm:$0x3f]
        %v776 = vld [vmem:[#allocation3 + $0x50] sm:$0xff]
        %v777 = vld [vmem:[#allocation3 + $0x58] sm:$0x3f]
        %v778 = vld [vmem:[#allocation3 + $0x60] sm:$0xff]
        %v779 = vld [vmem:[#allocation3 + $0x68] sm:$0x3f]
        %v780 = vld [vmem:[#allocation3 + $0x70] sm:$0xff]
        %v781 = vld [vmem:[#allocation3 + $0x78] sm:$0x3f]
        %vm798 = vcmask 1041408
        %v799 = vrot.slane %v766, 6
        %v800 = vrot.slane %v767, 6
        %v801 = vsel %vm798, %v799, %v800
        %v802 = vrot.slane %v768, 6
        %v803 = vrot.slane %v769, 6
        %v804 = vsel %vm798, %v802, %v803
        %v805 = vrot.slane %v770, 6
        %v806 = vrot.slane %v771, 6
        %v807 = vsel %vm798, %v805, %v806
        %v808 = vrot.slane %v772, 6
        %v809 = vrot.slane %v773, 6
        %v810 = vsel %vm798, %v808, %v809
        %v811 = vrot.slane %v774, 6
        %v812 = vrot.slane %v775, 6
        %v813 = vsel %vm798, %v811, %v812
        %v814 = vrot.slane %v776, 6
        %v815 = vrot.slane %v777, 6
        %v816 = vsel %vm798, %v814, %v815
        %v817 = vrot.slane %v778, 6
        %v818 = vrot.slane %v779, 6
        %v819 = vsel %vm798, %v817, %v818
        %v820 = vrot.slane %v780, 6
        %v821 = vrot.slane %v781, 6
        %v822 = vsel %vm798, %v820, %v821
        %vm839 = vcmask 261122
        %840 = vst.msk [vmem:[#allocation4] sm:$0xfc] %vm839, %v799
        %841 = vst.msk [vmem:[#allocation4 + $0x10] sm:$0xff] %vm426, %v801
        %842 = vst.msk [vmem:[#allocation4 + $0x20] sm:$0xfc] %vm839, %v802
        %843 = vst.msk [vmem:[#allocation4 + $0x30] sm:$0xff] %vm426, %v804
        %844 = vst.msk [vmem:[#allocation4 + $0x40] sm:$0xfc] %vm839, %v805
        %845 = vst.msk [vmem:[#allocation4 + $0x50] sm:$0xff] %vm426, %v807
        %846 = vst.msk [vmem:[#allocation4 + $0x60] sm:$0xfc] %vm839, %v808
        %847 = vst.msk [vmem:[#allocation4 + $0x70] sm:$0xff] %vm426, %v810
        %848 = vst.msk [vmem:[#allocation4 + $0x80] sm:$0xfc] %vm839, %v811
        %849 = vst.msk [vmem:[#allocation4 + $0x90] sm:$0xff] %vm426, %v813
        %850 = vst.msk [vmem:[#allocation4 + $0xa0] sm:$0xfc] %vm839, %v814
        %851 = vst.msk [vmem:[#allocation4 + $0xb0] sm:$0xff] %vm426, %v816
        %852 = vst.msk [vmem:[#allocation4 + $0xc0] sm:$0xfc] %vm839, %v817
        %853 = vst.msk [vmem:[#allocation4 + $0xd0] sm:$0xff] %vm426, %v819
        %854 = vst.msk [vmem:[#allocation4 + $0xe0] sm:$0xfc] %vm839, %v820
        %855 = vst.msk [vmem:[#allocation4 + $0xf0] sm:$0xff] %vm426, %v822
        %vm856 = vcmask 516352
        %857 = vst.msk [vmem:[#allocation4] sm:$0x1] %vm856, 0.0
        %858 = vst.msk [vmem:[#allocation4 + $0x20] sm:$0x1] %vm856, 0.0
        %859 = vst.msk [vmem:[#allocation4 + $0x40] sm:$0x1] %vm856, 0.0
        %860 = vst.msk [vmem:[#allocation4 + $0x60] sm:$0x1] %vm856, 0.0
        %861 = vst.msk [vmem:[#allocation4 + $0x80] sm:$0x1] %vm856, 0.0
        %862 = vst.msk [vmem:[#allocation4 + $0xa0] sm:$0x1] %vm856, 0.0
        %863 = vst.msk [vmem:[#allocation4 + $0xc0] sm:$0x1] %vm856, 0.0
        %864 = vst.msk [vmem:[#allocation4 + $0xe0] sm:$0x1] %vm856, 0.0
        %v865 = vld [vmem:[#allocation3] sm:$0xff]
        %v866 = vld [vmem:[#allocation3 + $0x8] sm:$0x7f]
        %v867 = vld [vmem:[#allocation3 + $0x10] sm:$0xff]
        %v868 = vld [vmem:[#allocation3 + $0x18] sm:$0x7f]
        %v869 = vld [vmem:[#allocation3 + $0x20] sm:$0xff]
        %v870 = vld [vmem:[#allocation3 + $0x28] sm:$0x7f]
        %v871 = vld [vmem:[#allocation3 + $0x30] sm:$0xff]
        %v872 = vld [vmem:[#allocation3 + $0x38] sm:$0x7f]
        %v873 = vld [vmem:[#allocation3 + $0x40] sm:$0xff]
        %v874 = vld [vmem:[#allocation3 + $0x48] sm:$0x7f]
        %v875 = vld [vmem:[#allocation3 + $0x50] sm:$0xff]
        %v876 = vld [vmem:[#allocation3 + $0x58] sm:$0x7f]
        %v877 = vld [vmem:[#allocation3 + $0x60] sm:$0xff]
        %v878 = vld [vmem:[#allocation3 + $0x68] sm:$0x7f]
        %v879 = vld [vmem:[#allocation3 + $0x70] sm:$0xff]
        %v880 = vld [vmem:[#allocation3 + $0x78] sm:$0x7f]
        %vm897 = vcmask 1040384
        %v898 = vrot.slane %v865, 7
        %v899 = vrot.slane %v866, 7
        %v900 = vsel %vm897, %v898, %v899
        %v901 = vrot.slane %v867, 7
        %v902 = vrot.slane %v868, 7
        %v903 = vsel %vm897, %v901, %v902
        %v904 = vrot.slane %v869, 7
        %v905 = vrot.slane %v870, 7
        %v906 = vsel %vm897, %v904, %v905
        %v907 = vrot.slane %v871, 7
        %v908 = vrot.slane %v872, 7
        %v909 = vsel %vm897, %v907, %v908
        %v910 = vrot.slane %v873, 7
        %v911 = vrot.slane %v874, 7
        %v912 = vsel %vm897, %v910, %v911
        %v913 = vrot.slane %v875, 7
        %v914 = vrot.slane %v876, 7
        %v915 = vsel %vm897, %v913, %v914
        %v916 = vrot.slane %v877, 7
        %v917 = vrot.slane %v878, 7
        %v918 = vsel %vm897, %v916, %v917
        %v919 = vrot.slane %v879, 7
        %v920 = vrot.slane %v880, 7
        %v921 = vsel %vm897, %v919, %v920
        %922 = vrot.lane.b32.xlu0 %v898, 32
        %v923 = vpop.permute.xlu0 %922
        %924 = vrot.lane.b32.xlu0 %v900, 32
        %v925 = vpop.permute.xlu0 %924
        %926 = vrot.lane.b32.xlu0 %v901, 32
        %v927 = vpop.permute.xlu0 %926
        %928 = vrot.lane.b32.xlu0 %v903, 32
        %v929 = vpop.permute.xlu0 %928
        %930 = vrot.lane.b32.xlu0 %v904, 32
        %v931 = vpop.permute.xlu0 %930
        %932 = vrot.lane.b32.xlu0 %v906, 32
        %v933 = vpop.permute.xlu0 %932
        %934 = vrot.lane.b32.xlu0 %v907, 32
        %v935 = vpop.permute.xlu0 %934
        %936 = vrot.lane.b32.xlu0 %v909, 32
        %v937 = vpop.permute.xlu0 %936
        %938 = vrot.lane.b32.xlu0 %v910, 32
        %v939 = vpop.permute.xlu0 %938
        %940 = vrot.lane.b32.xlu0 %v912, 32
        %v941 = vpop.permute.xlu0 %940
        %942 = vrot.lane.b32.xlu0 %v913, 32
        %v943 = vpop.permute.xlu0 %942
        %944 = vrot.lane.b32.xlu0 %v915, 32
        %v945 = vpop.permute.xlu0 %944
        %946 = vrot.lane.b32.xlu0 %v916, 32
        %v947 = vpop.permute.xlu0 %946
        %948 = vrot.lane.b32.xlu0 %v918, 32
        %v949 = vpop.permute.xlu0 %948
        %950 = vrot.lane.b32.xlu0 %v919, 32
        %v951 = vpop.permute.xlu0 %950
        %952 = vrot.lane.b32.xlu0 %v921, 32
        %v953 = vpop.permute.xlu0 %952
        %vm970 = vcmask 523521
        %971 = vst.msk [vmem:[#allocation4] sm:$0xfe] %vm970, %v923
        %vm972 = vcmask 523520
        %973 = vst.msk [vmem:[#allocation4 + $0x10] sm:$0xff] %vm972, %v925
        %974 = vst.msk [vmem:[#allocation4 + $0x20] sm:$0xfe] %vm970, %v927
        %975 = vst.msk [vmem:[#allocation4 + $0x30] sm:$0xff] %vm972, %v929
        %976 = vst.msk [vmem:[#allocation4 + $0x40] sm:$0xfe] %vm970, %v931
        %977 = vst.msk [vmem:[#allocation4 + $0x50] sm:$0xff] %vm972, %v933
        %978 = vst.msk [vmem:[#allocation4 + $0x60] sm:$0xfe] %vm970, %v935
        %979 = vst.msk [vmem:[#allocation4 + $0x70] sm:$0xff] %vm972, %v937
        %980 = vst.msk [vmem:[#allocation4 + $0x80] sm:$0xfe] %vm970, %v939
        %981 = vst.msk [vmem:[#allocation4 + $0x90] sm:$0xff] %vm972, %v941
        %982 = vst.msk [vmem:[#allocation4 + $0xa0] sm:$0xfe] %vm970, %v943
        %983 = vst.msk [vmem:[#allocation4 + $0xb0] sm:$0xff] %vm972, %v945
        %984 = vst.msk [vmem:[#allocation4 + $0xc0] sm:$0xfe] %vm970, %v947
        %985 = vst.msk [vmem:[#allocation4 + $0xd0] sm:$0xff] %vm972, %v949
        %986 = vst.msk [vmem:[#allocation4 + $0xe0] sm:$0xfe] %vm970, %v951
        %987 = vst.msk [vmem:[#allocation4 + $0xf0] sm:$0xff] %vm972, %v953
        %v988 = vld [vmem:[#allocation3] sm:$0xff]
        %v989 = vld [vmem:[#allocation3 + $0x8] sm:$0xff]
        %v990 = vld [vmem:[#allocation3 + $0x10] sm:$0xff]
        %v991 = vld [vmem:[#allocation3 + $0x18] sm:$0xff]
        %v992 = vld [vmem:[#allocation3 + $0x20] sm:$0xff]
        %v993 = vld [vmem:[#allocation3 + $0x28] sm:$0xff]
        %v994 = vld [vmem:[#allocation3 + $0x30] sm:$0xff]
        %v995 = vld [vmem:[#allocation3 + $0x38] sm:$0xff]
        %v996 = vld [vmem:[#allocation3 + $0x40] sm:$0xff]
        %v997 = vld [vmem:[#allocation3 + $0x48] sm:$0xff]
        %v998 = vld [vmem:[#allocation3 + $0x50] sm:$0xff]
        %v999 = vld [vmem:[#allocation3 + $0x58] sm:$0xff]
        %v1000 = vld [vmem:[#allocation3 + $0x60] sm:$0xff]
        %v1001 = vld [vmem:[#allocation3 + $0x68] sm:$0xff]
        %v1002 = vld [vmem:[#allocation3 + $0x70] sm:$0xff]
        %v1003 = vld [vmem:[#allocation3 + $0x78] sm:$0xff]
        %1020 = vrot.lane.b32.xlu0 %v988, 64
        %v1021 = vpop.permute.xlu0 %1020
        %1022 = vrot.lane.b32.xlu0 %v989, 64
        %v1023 = vpop.permute.xlu0 %1022
        %1024 = vrot.lane.b32.xlu0 %v990, 64
        %v1025 = vpop.permute.xlu0 %1024
        %1026 = vrot.lane.b32.xlu0 %v991, 64
        %v1027 = vpop.permute.xlu0 %1026
        %1028 = vrot.lane.b32.xlu0 %v992, 64
        %v1029 = vpop.permute.xlu0 %1028
        %1030 = vrot.lane.b32.xlu0 %v993, 64
        %v1031 = vpop.permute.xlu0 %1030
        %1032 = vrot.lane.b32.xlu0 %v994, 64
        %v1033 = vpop.permute.xlu0 %1032
        %1034 = vrot.lane.b32.xlu0 %v995, 64
        %v1035 = vpop.permute.xlu0 %1034
        %1036 = vrot.lane.b32.xlu0 %v996, 64
        %v1037 = vpop.permute.xlu0 %1036
        %1038 = vrot.lane.b32.xlu0 %v997, 64
        %v1039 = vpop.permute.xlu0 %1038
        %1040 = vrot.lane.b32.xlu0 %v998, 64
        %v1041 = vpop.permute.xlu0 %1040
        %1042 = vrot.lane.b32.xlu0 %v999, 64
        %v1043 = vpop.permute.xlu0 %1042
        %1044 = vrot.lane.b32.xlu0 %v1000, 64
        %v1045 = vpop.permute.xlu0 %1044
        %1046 = vrot.lane.b32.xlu0 %v1001, 64
        %v1047 = vpop.permute.xlu0 %1046
        %1048 = vrot.lane.b32.xlu0 %v1002, 64
        %v1049 = vpop.permute.xlu0 %1048
        %1050 = vrot.lane.b32.xlu0 %v1003, 64
        %v1051 = vpop.permute.xlu0 %1050
        %vm1068 = vcmask 785920
        %1069 = vst.msk [vmem:[#allocation4] sm:$0xff] %vm1068, %v1021
        %1070 = vst.msk [vmem:[#allocation4 + $0x10] sm:$0xff] %vm1068, %v1023
        %1071 = vst.msk [vmem:[#allocation4 + $0x20] sm:$0xff] %vm1068, %v1025
        %1072 = vst.msk [vmem:[#allocation4 + $0x30] sm:$0xff] %vm1068, %v1027
        %1073 = vst.msk [vmem:[#allocation4 + $0x40] sm:$0xff] %vm1068, %v1029
        %1074 = vst.msk [vmem:[#allocation4 + $0x50] sm:$0xff] %vm1068, %v1031
        %1075 = vst.msk [vmem:[#allocation4 + $0x60] sm:$0xff] %vm1068, %v1033
        %1076 = vst.msk [vmem:[#allocation4 + $0x70] sm:$0xff] %vm1068, %v1035
        %1077 = vst.msk [vmem:[#allocation4 + $0x80] sm:$0xff] %vm1068, %v1037
        %1078 = vst.msk [vmem:[#allocation4 + $0x90] sm:$0xff] %vm1068, %v1039
        %1079 = vst.msk [vmem:[#allocation4 + $0xa0] sm:$0xff] %vm1068, %v1041
        %1080 = vst.msk [vmem:[#allocation4 + $0xb0] sm:$0xff] %vm1068, %v1043
        %1081 = vst.msk [vmem:[#allocation4 + $0xc0] sm:$0xff] %vm1068, %v1045
        %1082 = vst.msk [vmem:[#allocation4 + $0xd0] sm:$0xff] %vm1068, %v1047
        %1083 = vst.msk [vmem:[#allocation4 + $0xe0] sm:$0xff] %vm1068, %v1049
        %1084 = vst.msk [vmem:[#allocation4 + $0xf0] sm:$0xff] %vm1068, %v1051
        %vm1085 = vcmask 1041152
        %1086 = vst.msk [vmem:[#allocation4 + $0x17] sm:$0x1] %vm1085, 0.0
        %1087 = vst.msk [vmem:[#allocation4 + $0x37] sm:$0x1] %vm1085, 0.0
        %1088 = vst.msk [vmem:[#allocation4 + $0x57] sm:$0x1] %vm1085, 0.0
        %1089 = vst.msk [vmem:[#allocation4 + $0x77] sm:$0x1] %vm1085, 0.0
        %1090 = vst.msk [vmem:[#allocation4 + $0x97] sm:$0x1] %vm1085, 0.0
        %1091 = vst.msk [vmem:[#allocation4 + $0xb7] sm:$0x1] %vm1085, 0.0
        %1092 = vst.msk [vmem:[#allocation4 + $0xd7] sm:$0x1] %vm1085, 0.0
        %1093 = vst.msk [vmem:[#allocation4 + $0xf7] sm:$0x1] %vm1085, 0.0
        %v1094 = vld [vmem:[#allocation3 + $0x1] sm:$0xff]
        %v1095 = vld [vmem:[#allocation3 + $0x9] sm:$0x7f]
        %v1096 = vld [vmem:[#allocation3 + $0x11] sm:$0xff]
        %v1097 = vld [vmem:[#allocation3 + $0x19] sm:$0x7f]
        %v1098 = vld [vmem:[#allocation3 + $0x21] sm:$0xff]
        %v1099 = vld [vmem:[#allocation3 + $0x29] sm:$0x7f]
        %v1100 = vld [vmem:[#allocation3 + $0x31] sm:$0xff]
        %v1101 = vld [vmem:[#allocation3 + $0x39] sm:$0x7f]
        %v1102 = vld [vmem:[#allocation3 + $0x41] sm:$0xff]
        %v1103 = vld [vmem:[#allocation3 + $0x49] sm:$0x7f]
        %v1104 = vld [vmem:[#allocation3 + $0x51] sm:$0xff]
        %v1105 = vld [vmem:[#allocation3 + $0x59] sm:$0x7f]
        %v1106 = vld [vmem:[#allocation3 + $0x61] sm:$0xff]
        %v1107 = vld [vmem:[#allocation3 + $0x69] sm:$0x7f]
        %v1108 = vld [vmem:[#allocation3 + $0x71] sm:$0xff]
        %v1109 = vld [vmem:[#allocation3 + $0x79] sm:$0x7f]
        %1126 = vrot.lane.b32.xlu0 %v1094, 96
        %v1127 = vpop.permute.xlu0 %1126
        %1128 = vrot.lane.b32.xlu0 %v1095, 96
        %v1129 = vpop.permute.xlu0 %1128
        %1130 = vrot.lane.b32.xlu0 %v1096, 96
        %v1131 = vpop.permute.xlu0 %1130
        %1132 = vrot.lane.b32.xlu0 %v1097, 96
        %v1133 = vpop.permute.xlu0 %1132
        %1134 = vrot.lane.b32.xlu0 %v1098, 96
        %v1135 = vpop.permute.xlu0 %1134
        %1136 = vrot.lane.b32.xlu0 %v1099, 96
        %v1137 = vpop.permute.xlu0 %1136
        %1138 = vrot.lane.b32.xlu0 %v1100, 96
        %v1139 = vpop.permute.xlu0 %1138
        %1140 = vrot.lane.b32.xlu0 %v1101, 96
        %v1141 = vpop.permute.xlu0 %1140
        %1142 = vrot.lane.b32.xlu0 %v1102, 96
        %v1143 = vpop.permute.xlu0 %1142
        %1144 = vrot.lane.b32.xlu0 %v1103, 96
        %v1145 = vpop.permute.xlu0 %1144
        %1146 = vrot.lane.b32.xlu0 %v1104, 96
        %v1147 = vpop.permute.xlu0 %1146
        %1148 = vrot.lane.b32.xlu0 %v1105, 96
        %v1149 = vpop.permute.xlu0 %1148
        %1150 = vrot.lane.b32.xlu0 %v1106, 96
        %v1151 = vpop.permute.xlu0 %1150
        %1152 = vrot.lane.b32.xlu0 %v1107, 96
        %v1153 = vpop.permute.xlu0 %1152
        %1154 = vrot.lane.b32.xlu0 %v1108, 96
        %v1155 = vpop.permute.xlu0 %1154
        %1156 = vrot.lane.b32.xlu0 %v1109, 96
        %v1157 = vpop.permute.xlu0 %1156
        %vm1174 = vcmask 1048320
        %1175 = vst.msk [vmem:[#allocation4] sm:$0xff] %vm1174, %v1127
        %vm1176 = vcmask 1047296
        %1177 = vst.msk [vmem:[#allocation4 + $0x10] sm:$0x7f] %vm1176, %v1129
        %1178 = vst.msk [vmem:[#allocation4 + $0x20] sm:$0xff] %vm1174, %v1131
        %1179 = vst.msk [vmem:[#allocation4 + $0x30] sm:$0x7f] %vm1176, %v1133
        %1180 = vst.msk [vmem:[#allocation4 + $0x40] sm:$0xff] %vm1174, %v1135
        %1181 = vst.msk [vmem:[#allocation4 + $0x50] sm:$0x7f] %vm1176, %v1137
        %1182 = vst.msk [vmem:[#allocation4 + $0x60] sm:$0xff] %vm1174, %v1139
        %1183 = vst.msk [vmem:[#allocation4 + $0x70] sm:$0x7f] %vm1176, %v1141
        %1184 = vst.msk [vmem:[#allocation4 + $0x80] sm:$0xff] %vm1174, %v1143
        %1185 = vst.msk [vmem:[#allocation4 + $0x90] sm:$0x7f] %vm1176, %v1145
        %1186 = vst.msk [vmem:[#allocation4 + $0xa0] sm:$0xff] %vm1174, %v1147
        %1187 = vst.msk [vmem:[#allocation4 + $0xb0] sm:$0x7f] %vm1176, %v1149
        %1188 = vst.msk [vmem:[#allocation4 + $0xc0] sm:$0xff] %vm1174, %v1151
        %1189 = vst.msk [vmem:[#allocation4 + $0xd0] sm:$0x7f] %vm1176, %v1153
        %1190 = vst.msk [vmem:[#allocation4 + $0xe0] sm:$0xff] %vm1174, %v1155
        %1191 = vst.msk [vmem:[#allocation4 + $0xf0] sm:$0x7f] %vm1176, %v1157
        %vm1192 = vcmask 261126
        %1193 = vst.msk [vmem:[#allocation4 + $0x18] sm:$0xc0] %vm1192, 0.0
        %1194 = vst.msk [vmem:[#allocation4 + $0x38] sm:$0xc0] %vm1192, 0.0
        %1195 = vst.msk [vmem:[#allocation4 + $0x58] sm:$0xc0] %vm1192, 0.0
        %1196 = vst.msk [vmem:[#allocation4 + $0x78] sm:$0xc0] %vm1192, 0.0
        %1197 = vst.msk [vmem:[#allocation4 + $0x98] sm:$0xc0] %vm1192, 0.0
        %1198 = vst.msk [vmem:[#allocation4 + $0xb8] sm:$0xc0] %vm1192, 0.0
        %1199 = vst.msk [vmem:[#allocation4 + $0xd8] sm:$0xc0] %vm1192, 0.0
        %1200 = vst.msk [vmem:[#allocation4 + $0xf8] sm:$0xc0] %vm1192, 0.0
        %v1201 = vld [vmem:[#allocation3 + $0x2] sm:$0xff]
        %v1202 = vld [vmem:[#allocation3 + $0xa] sm:$0x3f]
        %v1203 = vld [vmem:[#allocation3 + $0x12] sm:$0xff]
        %v1204 = vld [vmem:[#allocation3 + $0x1a] sm:$0x3f]
        %v1205 = vld [vmem:[#allocation3 + $0x22] sm:$0xff]
        %v1206 = vld [vmem:[#allocation3 + $0x2a] sm:$0x3f]
        %v1207 = vld [vmem:[#allocation3 + $0x32] sm:$0xff]
        %v1208 = vld [vmem:[#allocation3 + $0x3a] sm:$0x3f]
        %v1209 = vld [vmem:[#allocation3 + $0x42] sm:$0xff]
        %v1210 = vld [vmem:[#allocation3 + $0x4a] sm:$0x3f]
        %v1211 = vld [vmem:[#allocation3 + $0x52] sm:$0xff]
        %v1212 = vld [vmem:[#allocation3 + $0x5a] sm:$0x3f]
        %v1213 = vld [vmem:[#allocation3 + $0x62] sm:$0xff]
        %v1214 = vld [vmem:[#allocation3 + $0x6a] sm:$0x3f]
        %v1215 = vld [vmem:[#allocation3 + $0x72] sm:$0xff]
        %v1216 = vld [vmem:[#allocation3 + $0x7a] sm:$0x3f]
        %1217 = vst.msk [vmem:[#allocation4 + $0x8] sm:$0xff] %vm426, %v1201
        %vm1218 = vcmask 259072
        %1219 = vst.msk [vmem:[#allocation4 + $0x18] sm:$0x3f] %vm1218, %v1202
        %1220 = vst.msk [vmem:[#allocation4 + $0x28] sm:$0xff] %vm426, %v1203
        %1221 = vst.msk [vmem:[#allocation4 + $0x38] sm:$0x3f] %vm1218, %v1204
        %1222 = vst.msk [vmem:[#allocation4 + $0x48] sm:$0xff] %vm426, %v1205
        %1223 = vst.msk [vmem:[#allocation4 + $0x58] sm:$0x3f] %vm1218, %v1206
        %1224 = vst.msk [vmem:[#allocation4 + $0x68] sm:$0xff] %vm426, %v1207
        %1225 = vst.msk [vmem:[#allocation4 + $0x78] sm:$0x3f] %vm1218, %v1208
        %1226 = vst.msk [vmem:[#allocation4 + $0x88] sm:$0xff] %vm426, %v1209
        %1227 = vst.msk [vmem:[#allocation4 + $0x98] sm:$0x3f] %vm1218, %v1210
        %1228 = vst.msk [vmem:[#allocation4 + $0xa8] sm:$0xff] %vm426, %v1211
        %1229 = vst.msk [vmem:[#allocation4 + $0xb8] sm:$0x3f] %vm1218, %v1212
        %1230 = vst.msk [vmem:[#allocation4 + $0xc8] sm:$0xff] %vm426, %v1213
        %1231 = vst.msk [vmem:[#allocation4 + $0xd8] sm:$0x3f] %vm1218, %v1214
        %1232 = vst.msk [vmem:[#allocation4 + $0xe8] sm:$0xff] %vm426, %v1215
        %1233 = vst.msk [vmem:[#allocation4 + $0xf8] sm:$0x3f] %vm1218, %v1216
        %v1234 = vld [vmem:[#allocation4] sm:$0xff]
        %v1235 = vld [vmem:[#allocation4 + $0x8] sm:$0xff]
        %v1236 = vld [vmem:[#allocation4 + $0x10] sm:$0xff]
        %v1237 = vld [vmem:[#allocation4 + $0x18] sm:$0xff]
        %v1238 = vld [vmem:[#allocation4 + $0x20] sm:$0xff]
        %v1239 = vld [vmem:[#allocation4 + $0x28] sm:$0xff]
        %v1240 = vld [vmem:[#allocation4 + $0x30] sm:$0xff]
        %v1241 = vld [vmem:[#allocation4 + $0x38] sm:$0xff]
        %v1242 = vld [vmem:[#allocation4 + $0x40] sm:$0xff]
        %v1243 = vld [vmem:[#allocation4 + $0x48] sm:$0xff]
        %v1244 = vld [vmem:[#allocation4 + $0x50] sm:$0xff]
        %v1245 = vld [vmem:[#allocation4 + $0x58] sm:$0xff]
        %v1246 = vld [vmem:[#allocation4 + $0x60] sm:$0xff]
        %v1247 = vld [vmem:[#allocation4 + $0x68] sm:$0xff]
        %v1248 = vld [vmem:[#allocation4 + $0x70] sm:$0xff]
        %v1249 = vld [vmem:[#allocation4 + $0x78] sm:$0xff]
        %v1250 = vld [vmem:[#allocation4 + $0x80] sm:$0xff]
        %v1251 = vld [vmem:[#allocation4 + $0x88] sm:$0xff]
        %v1252 = vld [vmem:[#allocation4 + $0x90] sm:$0xff]
        %v1253 = vld [vmem:[#allocation4 + $0x98] sm:$0xff]
        %v1254 = vld [vmem:[#allocation4 + $0xa0] sm:$0xff]
        %v1255 = vld [vmem:[#allocation4 + $0xa8] sm:$0xff]
        %v1256 = vld [vmem:[#allocation4 + $0xb0] sm:$0xff]
        %v1257 = vld [vmem:[#allocation4 + $0xb8] sm:$0xff]
        %v1258 = vld [vmem:[#allocation4 + $0xc0] sm:$0xff]
        %v1259 = vld [vmem:[#allocation4 + $0xc8] sm:$0xff]
        %v1260 = vld [vmem:[#allocation4 + $0xd0] sm:$0xff]
        %v1261 = vld [vmem:[#allocation4 + $0xd8] sm:$0xff]
        %v1262 = vld [vmem:[#allocation4 + $0xe0] sm:$0xff]
        %v1263 = vld [vmem:[#allocation4 + $0xe8] sm:$0xff]
        %v1264 = vld [vmem:[#allocation4 + $0xf0] sm:$0xff]
        %v1265 = vld [vmem:[#allocation4 + $0xf8] sm:$0xff]
        %v1266 = vld [vmem:[%s3] sm:$0xff]
        %v1267 = vld [vmem:[%s3 + $0x8] sm:$0xff]
        %v1268 = vld [vmem:[%s3 + $0x10] sm:$0xff]
        %v1269 = vld [vmem:[%s3 + $0x18] sm:$0xff]
        %v1270 = vld [vmem:[%s3 + $0x20] sm:$0xff]
        %v1271 = vld [vmem:[%s3 + $0x28] sm:$0xff]
        %v1272 = vld [vmem:[%s3 + $0x30] sm:$0xff]
        %v1273 = vld [vmem:[%s3 + $0x38] sm:$0xff]
        %v1274 = vld [vmem:[%s3 + $0x40] sm:$0xff]
        %v1275 = vld [vmem:[%s3 + $0x48] sm:$0xff]
        %v1276 = vld [vmem:[%s3 + $0x50] sm:$0xff]
        %v1277 = vld [vmem:[%s3 + $0x58] sm:$0xff]
        %v1278 = vld [vmem:[%s3 + $0x60] sm:$0xff]
        %v1279 = vld [vmem:[%s3 + $0x68] sm:$0xff]
        %v1280 = vld [vmem:[%s3 + $0x70] sm:$0xff]
        %v1281 = vld [vmem:[%s3 + $0x78] sm:$0xff]
        %v1282 = vld [vmem:[%s3 + $0x80] sm:$0xff]
        %v1283 = vld [vmem:[%s3 + $0x88] sm:$0xff]
        %v1284 = vld [vmem:[%s3 + $0x90] sm:$0xff]
        %v1285 = vld [vmem:[%s3 + $0x98] sm:$0xff]
        %v1286 = vld [vmem:[%s4] sm:$0x1]
        %v1288 = vlaneseq
        %v1289 = vshrl.u32 %v1288, 7
        %v1290 = vsub.s32 0, %v1289
        %v1291 = vrot.slane %v1286, %v1290
        %v1294 = vsel %vm426, %v1235, 0
        %v1297 = vsel %vm426, %v1237, 0
        %v1300 = vsel %vm426, %v1239, 0
        %v1303 = vsel %vm426, %v1241, 0
        %v1306 = vsel %vm426, %v1243, 0
        %v1309 = vsel %vm426, %v1245, 0
        %v1312 = vsel %vm426, %v1247, 0
        %v1315 = vsel %vm426, %v1249, 0
        %v1318 = vsel %vm426, %v1251, 0
        %v1321 = vsel %vm426, %v1253, 0
        %v1324 = vsel %vm426, %v1255, 0
        %v1327 = vsel %vm426, %v1257, 0
        %v1330 = vsel %vm426, %v1259, 0
        %v1333 = vsel %vm426, %v1261, 0
        %v1336 = vsel %vm426, %v1263, 0
        %v1339 = vsel %vm426, %v1265, 0
        %1341 = vmatprep.subr.mxu0 0.0
        %1342 = vmatpush1.msra.mxu0 %v1266
        %1343 = vmatprep.subr.mxu0 0.0
        %1344 = vmatpush1.msra.mxu0 %v1267
        %1345 = vmatprep.subr.mxu0 0.0
        %1346 = vmatpush1.msra.mxu0 %v1268
        %1347 = vmatprep.subr.mxu0 0.0
        %1348 = vmatpush1.msra.mxu0 %v1269
        %1349 = vmatprep.subr.mxu0 0.0
        %1350 = vmatpush1.msra.mxu0 %v1270
        %1351 = vmatprep.subr.mxu0 0.0
        %1352 = vmatpush1.msra.mxu0 %v1271
        %1353 = vmatprep.subr.mxu0 0.0
        %1354 = vmatpush1.msra.mxu0 %v1272
        %1355 = vmatprep.subr.mxu0 0.0
        %1356 = vmatpush1.msra.mxu0 %v1273
        %1357 = vmatprep.subr.mxu0 0.0
        %1358 = vmatpush1.msra.mxu0 %v1274
        %1359 = vmatprep.subr.mxu0 0.0
        %1360 = vmatpush1.msra.mxu0 %v1275
        %1361 = vmatprep.subr.mxu0 0.0
        %1362 = vmatpush1.msra.mxu0 %v1276
        %1363 = vmatprep.subr.mxu0 0.0
        %1364 = vmatpush1.msra.mxu0 %v1277
        %1365 = vmatprep.subr.mxu0 0.0
        %1366 = vmatpush1.msra.mxu0 %v1278
        %1367 = vmatprep.subr.mxu0 0.0
        %1368 = vmatpush1.msra.mxu0 %v1279
        %1369 = vmatprep.subr.mxu0 0.0
        %1370 = vmatpush1.msra.mxu0 %v1280
        %1371 = vmatprep.subr.mxu0 0.0
        %1372 = vmatpush1.msra.mxu0 %v1281
        %1373 = vmatprep.subr.mxu0 0.0
        %1374 = vmatpush1.msra.mxu0 %v1282
        %1375 = vmatprep.subr.mxu0 0.0
        %1376 = vmatpush1.msra.mxu0 %v1283
        %1377 = vmatprep.subr.mxu0 0.0
        %1378 = vmatpush1.msra.mxu0 %v1284
        %1379 = vmatprep.subr.mxu0 0.0
        %1380 = vmatpush1.msra.mxu0 %v1285
        %1381 = vmatprep.subr.mxu0 0.0
        %1382 = vmatpush1.msra.mxu0 0.0
        %1383 = vmatprep.subr.mxu0 0.0
        %1384 = vmatpush1.msra.mxu0 0.0
        %1385 = vmatprep.subr.mxu0 0.0
        %1386 = vmatpush1.msra.mxu0 0.0
        %1387 = vmatprep.subr.mxu0 0.0
        %1388 = vmatpush1.msra.mxu0 0.0
        %1389 = vmatprep.subr.mxu0 0.0
        %1390 = vmatpush1.msra.mxu0 0.0
        %1391 = vmatprep.subr.mxu0 0.0
        %1392 = vmatpush1.msra.mxu0 0.0
        %1393 = vmatprep.subr.mxu0 0.0
        %1394 = vmatpush1.msra.mxu0 0.0
        %1395 = vmatprep.subr.mxu0 0.0
        %1396 = vmatpush1.msra.mxu0 0.0
        %1397 = vmatprep.subr.mxu0 0.0
        %1398 = vmatpush1.msra.mxu0 0.0
        %1399 = vmatprep.subr.mxu0 0.0
        %1400 = vmatpush1.msra.mxu0 0.0
        %1401 = vmatprep.subr.mxu0 0.0
        %1402 = vmatpush1.msra.mxu0 0.0
        %1403 = vmatprep.subr.mxu0 0.0
        %1404 = vmatpush1.msra.mxu0 0.0
        %1405 = vmatprep.mubr.f32.mxu0 %v1294
        %1406 = vmatmul.mubr.f32.gmra.mrb[0].mxu0 %v1234
        %v1407 = vpop.f32.mrb[0].mxu0
        %v1408 = vadd.f32 %v1291, %v1407
        %v1409 = vpop.f32.mrb[0].mxu0
        %1410 = vmatprep.mubr.f32.mxu0 %v1297
        %1411 = vmatmul.mubr.f32.gmra.mrb[0].mxu0 %v1236
        %v1412 = vpop.f32.mrb[0].mxu0
        %v1413 = vadd.f32 %v1291, %v1412
        %v1414 = vpop.f32.mrb[0].mxu0
        %1415 = vmatprep.mubr.f32.mxu0 %v1300
        %1416 = vmatmul.mubr.f32.gmra.mrb[0].mxu0 %v1238
        %v1417 = vpop.f32.mrb[0].mxu0
        %v1418 = vadd.f32 %v1291, %v1417
        %v1419 = vpop.f32.mrb[0].mxu0
        %1420 = vmatprep.mubr.f32.mxu0 %v1303
        %1421 = vmatmul.mubr.f32.gmra.mrb[0].mxu0 %v1240
        %v1422 = vpop.f32.mrb[0].mxu0
        %v1423 = vadd.f32 %v1291, %v1422
        %v1424 = vpop.f32.mrb[0].mxu0
        %1425 = vmatprep.mubr.f32.mxu0 %v1306
        %1426 = vmatmul.mubr.f32.gmra.mrb[0].mxu0 %v1242
        %v1427 = vpop.f32.mrb[0].mxu0
        %v1428 = vadd.f32 %v1291, %v1427
        %v1429 = vpop.f32.mrb[0].mxu0
        %1430 = vmatprep.mubr.f32.mxu0 %v1309
        %1431 = vmatmul.mubr.f32.gmra.mrb[0].mxu0 %v1244
        %v1432 = vpop.f32.mrb[0].mxu0
        %v1433 = vadd.f32 %v1291, %v1432
        %v1434 = vpop.f32.mrb[0].mxu0
        %1435 = vmatprep.mubr.f32.mxu0 %v1312
        %1436 = vmatmul.mubr.f32.gmra.mrb[0].mxu0 %v1246
        %v1437 = vpop.f32.mrb[0].mxu0
        %v1438 = vadd.f32 %v1291, %v1437
        %v1439 = vpop.f32.mrb[0].mxu0
        %1440 = vmatprep.mubr.f32.mxu0 %v1315
        %1441 = vmatmul.mubr.f32.gmra.mrb[0].mxu0 %v1248
        %v1442 = vpop.f32.mrb[0].mxu0
        %v1443 = vadd.f32 %v1291, %v1442
        %v1444 = vpop.f32.mrb[0].mxu0
        %1445 = vmatprep.mubr.f32.mxu0 %v1318
        %1446 = vmatmul.mubr.f32.gmra.mrb[0].mxu0 %v1250
        %v1447 = vpop.f32.mrb[0].mxu0
        %v1448 = vadd.f32 %v1291, %v1447
        %v1449 = vpop.f32.mrb[0].mxu0
        %1450 = vmatprep.mubr.f32.mxu0 %v1321
        %1451 = vmatmul.mubr.f32.gmra.mrb[0].mxu0 %v1252
        %v1452 = vpop.f32.mrb[0].mxu0
        %v1453 = vadd.f32 %v1291, %v1452
        %v1454 = vpop.f32.mrb[0].mxu0
        %1455 = vmatprep.mubr.f32.mxu0 %v1324
        %1456 = vmatmul.mubr.f32.gmra.mrb[0].mxu0 %v1254
        %v1457 = vpop.f32.mrb[0].mxu0
        %v1458 = vadd.f32 %v1291, %v1457
        %v1459 = vpop.f32.mrb[0].mxu0
        %1460 = vmatprep.mubr.f32.mxu0 %v1327
        %1461 = vmatmul.mubr.f32.gmra.mrb[0].mxu0 %v1256
        %v1462 = vpop.f32.mrb[0].mxu0
        %v1463 = vadd.f32 %v1291, %v1462
        %v1464 = vpop.f32.mrb[0].mxu0
        %1465 = vmatprep.mubr.f32.mxu0 %v1330
        %1466 = vmatmul.mubr.f32.gmra.mrb[0].mxu0 %v1258
        %v1467 = vpop.f32.mrb[0].mxu0
        %v1468 = vadd.f32 %v1291, %v1467
        %v1469 = vpop.f32.mrb[0].mxu0
        %1470 = vmatprep.mubr.f32.mxu0 %v1333
        %1471 = vmatmul.mubr.f32.gmra.mrb[0].mxu0 %v1260
        %v1472 = vpop.f32.mrb[0].mxu0
        %v1473 = vadd.f32 %v1291, %v1472
        %v1474 = vpop.f32.mrb[0].mxu0
        %1475 = vmatprep.mubr.f32.mxu0 %v1336
        %1476 = vmatmul.mubr.f32.gmra.mrb[0].mxu0 %v1262
        %v1477 = vpop.f32.mrb[0].mxu0
        %v1478 = vadd.f32 %v1291, %v1477
        %v1479 = vpop.f32.mrb[0].mxu0
        %1480 = vmatprep.mubr.f32.mxu0 %v1339
        %1481 = vmatmul.mubr.f32.gmra.mrb[0].mxu0 %v1264
        %v1482 = vpop.f32.mrb[0].mxu0
        %v1483 = vadd.f32 %v1291, %v1482
        %v1484 = vpop.f32.mrb[0].mxu0
        %1485 = vdwg.mxu0
        %v1486 = vmax.f32 %v1408, 0.0
        %v1487 = vmax.f32 %v1413, 0.0
        %v1488 = vmax.f32 %v1418, 0.0
        %v1489 = vmax.f32 %v1423, 0.0
        %v1490 = vmax.f32 %v1428, 0.0
        %v1491 = vmax.f32 %v1433, 0.0
        %v1492 = vmax.f32 %v1438, 0.0
        %v1493 = vmax.f32 %v1443, 0.0
        %v1494 = vmax.f32 %v1448, 0.0
        %v1495 = vmax.f32 %v1453, 0.0
        %v1496 = vmax.f32 %v1458, 0.0
        %v1497 = vmax.f32 %v1463, 0.0
        %v1498 = vmax.f32 %v1468, 0.0
        %v1499 = vmax.f32 %v1473, 0.0
        %v1500 = vmax.f32 %v1478, 0.0
        %v1501 = vmax.f32 %v1483, 0.0
        %vm1502 = vcmask 523264
        %1503 = vst.msk [vmem:[#allocation5] sm:$0xff] %vm1502, %v1486
        %1504 = vst.msk [vmem:[#allocation5 + $0x8] sm:$0xff] %vm1502, %v1487
        %1505 = vst.msk [vmem:[#allocation5 + $0x10] sm:$0xff] %vm1502, %v1488
        %1506 = vst.msk [vmem:[#allocation5 + $0x18] sm:$0xff] %vm1502, %v1489
        %1507 = vst.msk [vmem:[#allocation5 + $0x20] sm:$0xff] %vm1502, %v1490
        %1508 = vst.msk [vmem:[#allocation5 + $0x28] sm:$0xff] %vm1502, %v1491
        %1509 = vst.msk [vmem:[#allocation5 + $0x30] sm:$0xff] %vm1502, %v1492
        %1510 = vst.msk [vmem:[#allocation5 + $0x38] sm:$0xff] %vm1502, %v1493
        %1511 = vst.msk [vmem:[#allocation5 + $0x40] sm:$0xff] %vm1502, %v1494
        %1512 = vst.msk [vmem:[#allocation5 + $0x48] sm:$0xff] %vm1502, %v1495
        %1513 = vst.msk [vmem:[#allocation5 + $0x50] sm:$0xff] %vm1502, %v1496
        %1514 = vst.msk [vmem:[#allocation5 + $0x58] sm:$0xff] %vm1502, %v1497
        %1515 = vst.msk [vmem:[#allocation5 + $0x60] sm:$0xff] %vm1502, %v1498
        %1516 = vst.msk [vmem:[#allocation5 + $0x68] sm:$0xff] %vm1502, %v1499
        %1517 = vst.msk [vmem:[#allocation5 + $0x70] sm:$0xff] %vm1502, %v1500
        %1518 = vst.msk [vmem:[#allocation5 + $0x78] sm:$0xff] %vm1502, %v1501
        %v1519 = vld [vmem:[#allocation5] sm:$0x1]
        %v1520 = vld [vmem:[#allocation5 + $0x10] sm:$0x1]
        %v1521 = vld [vmem:[#allocation5 + $0x20] sm:$0x1]
        %v1522 = vld [vmem:[#allocation5 + $0x30] sm:$0x1]
        %v1523 = vld [vmem:[#allocation5 + $0x40] sm:$0x1]
        %v1524 = vld [vmem:[#allocation5 + $0x50] sm:$0x1]
        %v1525 = vld [vmem:[#allocation5 + $0x60] sm:$0x1]
        %v1526 = vld [vmem:[#allocation5 + $0x70] sm:$0x1]
        %v1527 = vld [vmem:[#allocation5 + $0x1] sm:$0x1]
        %v1528 = vld [vmem:[#allocation5 + $0x11] sm:$0x1]
        %v1529 = vld [vmem:[#allocation5 + $0x21] sm:$0x1]
        %v1530 = vld [vmem:[#allocation5 + $0x31] sm:$0x1]
        %v1531 = vld [vmem:[#allocation5 + $0x41] sm:$0x1]
        %v1532 = vld [vmem:[#allocation5 + $0x51] sm:$0x1]
        %v1533 = vld [vmem:[#allocation5 + $0x61] sm:$0x1]
        %v1534 = vld [vmem:[#allocation5 + $0x71] sm:$0x1]
        %v1535 = vmax.f32 %v1519, %v1527
        %v1536 = vmax.f32 %v1520, %v1528
        %v1537 = vmax.f32 %v1521, %v1529
        %v1538 = vmax.f32 %v1522, %v1530
        %v1539 = vmax.f32 %v1523, %v1531
        %v1540 = vmax.f32 %v1524, %v1532
        %v1541 = vmax.f32 %v1525, %v1533
        %v1542 = vmax.f32 %v1526, %v1534
        %v1551 = vrot.slane %v1536, 7
        %vm1552 = vcmask 1041409
        %v1553 = vsel %vm1552, %v1551, %v1535
        %v1554 = vrot.slane %v1537, 6
        %vm1555 = vcmask 1042434
        %v1556 = vsel %vm1555, %v1554, %v1553
        %v1557 = vrot.slane %v1538, 5
        %vm1558 = vcmask 1043459
        %v1559 = vsel %vm1558, %v1557, %v1556
        %v1560 = vrot.slane %v1539, 4
        %vm1561 = vcmask 1044484
        %v1562 = vsel %vm1561, %v1560, %v1559
        %v1563 = vrot.slane %v1540, 3
        %vm1564 = vcmask 1045509
        %v1565 = vsel %vm1564, %v1563, %v1562
        %v1566 = vrot.slane %v1541, 2
        %vm1567 = vcmask 1046534
        %v1568 = vsel %vm1567, %v1566, %v1565
        %v1569 = vrot.slane %v1542, 1
        %vm1570 = vcmask 1047559
        %v1571 = vsel %vm1570, %v1569, %v1568
        %1573 = vst.msk [vmem:[#allocation6] sm:$0xff] %vm1502, %v1571
        %v1574 = vld [vmem:[#allocation5 + $0x2] sm:$0x1]
        %v1575 = vld [vmem:[#allocation5 + $0x12] sm:$0x1]
        %v1576 = vld [vmem:[#allocation5 + $0x22] sm:$0x1]
        %v1577 = vld [vmem:[#allocation5 + $0x32] sm:$0x1]
        %v1578 = vld [vmem:[#allocation5 + $0x42] sm:$0x1]
        %v1579 = vld [vmem:[#allocation5 + $0x52] sm:$0x1]
        %v1580 = vld [vmem:[#allocation5 + $0x62] sm:$0x1]
        %v1581 = vld [vmem:[#allocation5 + $0x72] sm:$0x1]
        %v1582 = vld [vmem:[#allocation5 + $0x3] sm:$0x1]
        %v1583 = vld [vmem:[#allocation5 + $0x13] sm:$0x1]
        %v1584 = vld [vmem:[#allocation5 + $0x23] sm:$0x1]
        %v1585 = vld [vmem:[#allocation5 + $0x33] sm:$0x1]
        %v1586 = vld [vmem:[#allocation5 + $0x43] sm:$0x1]
        %v1587 = vld [vmem:[#allocation5 + $0x53] sm:$0x1]
        %v1588 = vld [vmem:[#allocation5 + $0x63] sm:$0x1]
        %v1589 = vld [vmem:[#allocation5 + $0x73] sm:$0x1]
        %v1590 = vmax.f32 %v1574, %v1582
        %v1591 = vmax.f32 %v1575, %v1583
        %v1592 = vmax.f32 %v1576, %v1584
        %v1593 = vmax.f32 %v1577, %v1585
        %v1594 = vmax.f32 %v1578, %v1586
        %v1595 = vmax.f32 %v1579, %v1587
        %v1596 = vmax.f32 %v1580, %v1588
        %v1597 = vmax.f32 %v1581, %v1589
        %v1606 = vrot.slane %v1591, 7
        %v1607 = vsel %vm1552, %v1606, %v1590
        %v1608 = vrot.slane %v1592, 6
        %v1609 = vsel %vm1555, %v1608, %v1607
        %v1610 = vrot.slane %v1593, 5
        %v1611 = vsel %vm1558, %v1610, %v1609
        %v1612 = vrot.slane %v1594, 4
        %v1613 = vsel %vm1561, %v1612, %v1611
        %v1614 = vrot.slane %v1595, 3
        %v1615 = vsel %vm1564, %v1614, %v1613
        %v1616 = vrot.slane %v1596, 2
        %v1617 = vsel %vm1567, %v1616, %v1615
        %v1618 = vrot.slane %v1597, 1
        %v1619 = vsel %vm1570, %v1618, %v1617
        %1620 = vrot.lane.b32.xlu0 %v1619, 64
        %v1621 = vpop.permute.xlu0 %1620
        %vm1623 = vcmask 1048064
        %1624 = vst.msk [vmem:[#allocation6] sm:$0xff] %vm1623, %v1621
        %v1625 = vld [vmem:[#allocation5 + $0x4] sm:$0x1]
        %v1626 = vld [vmem:[#allocation5 + $0x14] sm:$0x1]
        %v1627 = vld [vmem:[#allocation5 + $0x24] sm:$0x1]
        %v1628 = vld [vmem:[#allocation5 + $0x34] sm:$0x1]
        %v1629 = vld [vmem:[#allocation5 + $0x44] sm:$0x1]
        %v1630 = vld [vmem:[#allocation5 + $0x54] sm:$0x1]
        %v1631 = vld [vmem:[#allocation5 + $0x64] sm:$0x1]
        %v1632 = vld [vmem:[#allocation5 + $0x74] sm:$0x1]
        %v1633 = vld [vmem:[#allocation5 + $0x5] sm:$0x1]
        %v1634 = vld [vmem:[#allocation5 + $0x15] sm:$0x1]
        %v1635 = vld [vmem:[#allocation5 + $0x25] sm:$0x1]
        %v1636 = vld [vmem:[#allocation5 + $0x35] sm:$0x1]
        %v1637 = vld [vmem:[#allocation5 + $0x45] sm:$0x1]
        %v1638 = vld [vmem:[#allocation5 + $0x55] sm:$0x1]
        %v1639 = vld [vmem:[#allocation5 + $0x65] sm:$0x1]
        %v1640 = vld [vmem:[#allocation5 + $0x75] sm:$0x1]
        %v1641 = vmax.f32 %v1625, %v1633
        %v1642 = vmax.f32 %v1626, %v1634
        %v1643 = vmax.f32 %v1627, %v1635
        %v1644 = vmax.f32 %v1628, %v1636
        %v1645 = vmax.f32 %v1629, %v1637
        %v1646 = vmax.f32 %v1630, %v1638
        %v1647 = vmax.f32 %v1631, %v1639
        %v1648 = vmax.f32 %v1632, %v1640
        %v1657 = vrot.slane %v1642, 7
        %v1658 = vsel %vm1552, %v1657, %v1641
        %v1659 = vrot.slane %v1643, 6
        %v1660 = vsel %vm1555, %v1659, %v1658
        %v1661 = vrot.slane %v1644, 5
        %v1662 = vsel %vm1558, %v1661, %v1660
        %v1663 = vrot.slane %v1645, 4
        %v1664 = vsel %vm1561, %v1663, %v1662
        %v1665 = vrot.slane %v1646, 3
        %v1666 = vsel %vm1564, %v1665, %v1664
        %v1667 = vrot.slane %v1647, 2
        %v1668 = vsel %vm1567, %v1667, %v1666
        %v1669 = vrot.slane %v1648, 1
        %v1670 = vsel %vm1570, %v1669, %v1668
        %1672 = vst.msk [vmem:[#allocation6 + $0x8] sm:$0xff] %vm1502, %v1670
        %v1673 = vld [vmem:[#allocation5 + $0x6] sm:$0x1]
        %v1674 = vld [vmem:[#allocation5 + $0x16] sm:$0x1]
        %v1675 = vld [vmem:[#allocation5 + $0x26] sm:$0x1]
        %v1676 = vld [vmem:[#allocation5 + $0x36] sm:$0x1]
        %v1677 = vld [vmem:[#allocation5 + $0x46] sm:$0x1]
        %v1678 = vld [vmem:[#allocation5 + $0x56] sm:$0x1]
        %v1679 = vld [vmem:[#allocation5 + $0x66] sm:$0x1]
        %v1680 = vld [vmem:[#allocation5 + $0x76] sm:$0x1]
        %v1681 = vld [vmem:[#allocation5 + $0x7] sm:$0x1]
        %v1682 = vld [vmem:[#allocation5 + $0x17] sm:$0x1]
        %v1683 = vld [vmem:[#allocation5 + $0x27] sm:$0x1]
        %v1684 = vld [vmem:[#allocation5 + $0x37] sm:$0x1]
        %v1685 = vld [vmem:[#allocation5 + $0x47] sm:$0x1]
        %v1686 = vld [vmem:[#allocation5 + $0x57] sm:$0x1]
        %v1687 = vld [vmem:[#allocation5 + $0x67] sm:$0x1]
        %v1688 = vld [vmem:[#allocation5 + $0x77] sm:$0x1]
        %v1689 = vmax.f32 %v1673, %v1681
        %v1690 = vmax.f32 %v1674, %v1682
        %v1691 = vmax.f32 %v1675, %v1683
        %v1692 = vmax.f32 %v1676, %v1684
        %v1693 = vmax.f32 %v1677, %v1685
        %v1694 = vmax.f32 %v1678, %v1686
        %v1695 = vmax.f32 %v1679, %v1687
        %v1696 = vmax.f32 %v1680, %v1688
        %v1705 = vrot.slane %v1690, 7
        %v1706 = vsel %vm1552, %v1705, %v1689
        %v1707 = vrot.slane %v1691, 6
        %v1708 = vsel %vm1555, %v1707, %v1706
        %v1709 = vrot.slane %v1692, 5
        %v1710 = vsel %vm1558, %v1709, %v1708
        %v1711 = vrot.slane %v1693, 4
        %v1712 = vsel %vm1561, %v1711, %v1710
        %v1713 = vrot.slane %v1694, 3
        %v1714 = vsel %vm1564, %v1713, %v1712
        %v1715 = vrot.slane %v1695, 2
        %v1716 = vsel %vm1567, %v1715, %v1714
        %v1717 = vrot.slane %v1696, 1
        %v1718 = vsel %vm1570, %v1717, %v1716
        %1719 = vrot.lane.b32.xlu0 %v1718, 64
        %v1720 = vpop.permute.xlu0 %1719
        %1722 = vst.msk [vmem:[#allocation6 + $0x8] sm:$0xff] %vm1623, %v1720
        %v1723 = vld [vmem:[#allocation5 + $0x8] sm:$0x1]
        %v1724 = vld [vmem:[#allocation5 + $0x18] sm:$0x1]
        %v1725 = vld [vmem:[#allocation5 + $0x28] sm:$0x1]
        %v1726 = vld [vmem:[#allocation5 + $0x38] sm:$0x1]
        %v1727 = vld [vmem:[#allocation5 + $0x48] sm:$0x1]
        %v1728 = vld [vmem:[#allocation5 + $0x58] sm:$0x1]
        %v1729 = vld [vmem:[#allocation5 + $0x68] sm:$0x1]
        %v1730 = vld [vmem:[#allocation5 + $0x78] sm:$0x1]
        %v1731 = vld [vmem:[#allocation5 + $0x9] sm:$0x1]
        %v1732 = vld [vmem:[#allocation5 + $0x19] sm:$0x1]
        %v1733 = vld [vmem:[#allocation5 + $0x29] sm:$0x1]
        %v1734 = vld [vmem:[#allocation5 + $0x39] sm:$0x1]
        %v1735 = vld [vmem:[#allocation5 + $0x49] sm:$0x1]
        %v1736 = vld [vmem:[#allocation5 + $0x59] sm:$0x1]
        %v1737 = vld [vmem:[#allocation5 + $0x69] sm:$0x1]
        %v1738 = vld [vmem:[#allocation5 + $0x79] sm:$0x1]
        %v1739 = vmax.f32 %v1723, %v1731
        %v1740 = vmax.f32 %v1724, %v1732
        %v1741 = vmax.f32 %v1725, %v1733
        %v1742 = vmax.f32 %v1726, %v1734
        %v1743 = vmax.f32 %v1727, %v1735
        %v1744 = vmax.f32 %v1728, %v1736
        %v1745 = vmax.f32 %v1729, %v1737
        %v1746 = vmax.f32 %v1730, %v1738
        %v1755 = vrot.slane %v1740, 7
        %v1756 = vsel %vm1552, %v1755, %v1739
        %v1757 = vrot.slane %v1741, 6
        %v1758 = vsel %vm1555, %v1757, %v1756
        %v1759 = vrot.slane %v1742, 5
        %v1760 = vsel %vm1558, %v1759, %v1758
        %v1761 = vrot.slane %v1743, 4
        %v1762 = vsel %vm1561, %v1761, %v1760
        %v1763 = vrot.slane %v1744, 3
        %v1764 = vsel %vm1564, %v1763, %v1762
        %v1765 = vrot.slane %v1745, 2
        %v1766 = vsel %vm1567, %v1765, %v1764
        %v1767 = vrot.slane %v1746, 1
        %v1768 = vsel %vm1570, %v1767, %v1766
        %1770 = vst.msk [vmem:[#allocation6 + $0x10] sm:$0xff] %vm1502, %v1768
        %v1771 = vld [vmem:[#allocation5 + $0xa] sm:$0x1]
        %v1772 = vld [vmem:[#allocation5 + $0x1a] sm:$0x1]
        %v1773 = vld [vmem:[#allocation5 + $0x2a] sm:$0x1]
        %v1774 = vld [vmem:[#allocation5 + $0x3a] sm:$0x1]
        %v1775 = vld [vmem:[#allocation5 + $0x4a] sm:$0x1]
        %v1776 = vld [vmem:[#allocation5 + $0x5a] sm:$0x1]
        %v1777 = vld [vmem:[#allocation5 + $0x6a] sm:$0x1]
        %v1778 = vld [vmem:[#allocation5 + $0x7a] sm:$0x1]
        %v1779 = vld [vmem:[#allocation5 + $0xb] sm:$0x1]
        %v1780 = vld [vmem:[#allocation5 + $0x1b] sm:$0x1]
        %v1781 = vld [vmem:[#allocation5 + $0x2b] sm:$0x1]
        %v1782 = vld [vmem:[#allocation5 + $0x3b] sm:$0x1]
        %v1783 = vld [vmem:[#allocation5 + $0x4b] sm:$0x1]
        %v1784 = vld [vmem:[#allocation5 + $0x5b] sm:$0x1]
        %v1785 = vld [vmem:[#allocation5 + $0x6b] sm:$0x1]
        %v1786 = vld [vmem:[#allocation5 + $0x7b] sm:$0x1]
        %v1787 = vmax.f32 %v1771, %v1779
        %v1788 = vmax.f32 %v1772, %v1780
        %v1789 = vmax.f32 %v1773, %v1781
        %v1790 = vmax.f32 %v1774, %v1782
        %v1791 = vmax.f32 %v1775, %v1783
        %v1792 = vmax.f32 %v1776, %v1784
        %v1793 = vmax.f32 %v1777, %v1785
        %v1794 = vmax.f32 %v1778, %v1786
        %v1803 = vrot.slane %v1788, 7
        %v1804 = vsel %vm1552, %v1803, %v1787
        %v1805 = vrot.slane %v1789, 6
        %v1806 = vsel %vm1555, %v1805, %v1804
        %v1807 = vrot.slane %v1790, 5
        %v1808 = vsel %vm1558, %v1807, %v1806
        %v1809 = vrot.slane %v1791, 4
        %v1810 = vsel %vm1561, %v1809, %v1808
        %v1811 = vrot.slane %v1792, 3
        %v1812 = vsel %vm1564, %v1811, %v1810
        %v1813 = vrot.slane %v1793, 2
        %v1814 = vsel %vm1567, %v1813, %v1812
        %v1815 = vrot.slane %v1794, 1
        %v1816 = vsel %vm1570, %v1815, %v1814
        %1817 = vrot.lane.b32.xlu0 %v1816, 64
        %v1818 = vpop.permute.xlu0 %1817
        %1820 = vst.msk [vmem:[#allocation6 + $0x10] sm:$0xff] %vm1623, %v1818
        %v1821 = vld [vmem:[#allocation5 + $0xc] sm:$0x1]
        %v1822 = vld [vmem:[#allocation5 + $0x1c] sm:$0x1]
        %v1823 = vld [vmem:[#allocation5 + $0x2c] sm:$0x1]
        %v1824 = vld [vmem:[#allocation5 + $0x3c] sm:$0x1]
        %v1825 = vld [vmem:[#allocation5 + $0x4c] sm:$0x1]
        %v1826 = vld [vmem:[#allocation5 + $0x5c] sm:$0x1]
        %v1827 = vld [vmem:[#allocation5 + $0x6c] sm:$0x1]
        %v1828 = vld [vmem:[#allocation5 + $0x7c] sm:$0x1]
        %v1829 = vld [vmem:[#allocation5 + $0xd] sm:$0x1]
        %v1830 = vld [vmem:[#allocation5 + $0x1d] sm:$0x1]
        %v1831 = vld [vmem:[#allocation5 + $0x2d] sm:$0x1]
        %v1832 = vld [vmem:[#allocation5 + $0x3d] sm:$0x1]
        %v1833 = vld [vmem:[#allocation5 + $0x4d] sm:$0x1]
        %v1834 = vld [vmem:[#allocation5 + $0x5d] sm:$0x1]
        %v1835 = vld [vmem:[#allocation5 + $0x6d] sm:$0x1]
        %v1836 = vld [vmem:[#allocation5 + $0x7d] sm:$0x1]
        %v1837 = vmax.f32 %v1821, %v1829
        %v1838 = vmax.f32 %v1822, %v1830
        %v1839 = vmax.f32 %v1823, %v1831
        %v1840 = vmax.f32 %v1824, %v1832
        %v1841 = vmax.f32 %v1825, %v1833
        %v1842 = vmax.f32 %v1826, %v1834
        %v1843 = vmax.f32 %v1827, %v1835
        %v1844 = vmax.f32 %v1828, %v1836
        %v1853 = vrot.slane %v1838, 7
        %v1854 = vsel %vm1552, %v1853, %v1837
        %v1855 = vrot.slane %v1839, 6
        %v1856 = vsel %vm1555, %v1855, %v1854
        %v1857 = vrot.slane %v1840, 5
        %v1858 = vsel %vm1558, %v1857, %v1856
        %v1859 = vrot.slane %v1841, 4
        %v1860 = vsel %vm1561, %v1859, %v1858
        %v1861 = vrot.slane %v1842, 3
        %v1862 = vsel %vm1564, %v1861, %v1860
        %v1863 = vrot.slane %v1843, 2
        %v1864 = vsel %vm1567, %v1863, %v1862
        %v1865 = vrot.slane %v1844, 1
        %v1866 = vsel %vm1570, %v1865, %v1864
        %1868 = vst.msk [vmem:[#allocation6 + $0x18] sm:$0xff] %vm1502, %v1866
        %v1869 = vld [vmem:[#allocation5 + $0xe] sm:$0x1]
        %v1870 = vld [vmem:[#allocation5 + $0x1e] sm:$0x1]
        %v1871 = vld [vmem:[#allocation5 + $0x2e] sm:$0x1]
        %v1872 = vld [vmem:[#allocation5 + $0x3e] sm:$0x1]
        %v1873 = vld [vmem:[#allocation5 + $0x4e] sm:$0x1]
        %v1874 = vld [vmem:[#allocation5 + $0x5e] sm:$0x1]
        %v1875 = vld [vmem:[#allocation5 + $0x6e] sm:$0x1]
        %v1876 = vld [vmem:[#allocation5 + $0x7e] sm:$0x1]
        %v1877 = vld [vmem:[#allocation5 + $0xf] sm:$0x1]
        %v1878 = vld [vmem:[#allocation5 + $0x1f] sm:$0x1]
        %v1879 = vld [vmem:[#allocation5 + $0x2f] sm:$0x1]
        %v1880 = vld [vmem:[#allocation5 + $0x3f] sm:$0x1]
        %v1881 = vld [vmem:[#allocation5 + $0x4f] sm:$0x1]
        %v1882 = vld [vmem:[#allocation5 + $0x5f] sm:$0x1]
        %v1883 = vld [vmem:[#allocation5 + $0x6f] sm:$0x1]
        %v1884 = vld [vmem:[#allocation5 + $0x7f] sm:$0x1]
        %v1885 = vmax.f32 %v1869, %v1877
        %v1886 = vmax.f32 %v1870, %v1878
        %v1887 = vmax.f32 %v1871, %v1879
        %v1888 = vmax.f32 %v1872, %v1880
        %v1889 = vmax.f32 %v1873, %v1881
        %v1890 = vmax.f32 %v1874, %v1882
        %v1891 = vmax.f32 %v1875, %v1883
        %v1892 = vmax.f32 %v1876, %v1884
        %v1901 = vrot.slane %v1886, 7
        %v1902 = vsel %vm1552, %v1901, %v1885
        %v1903 = vrot.slane %v1887, 6
        %v1904 = vsel %vm1555, %v1903, %v1902
        %v1905 = vrot.slane %v1888, 5
        %v1906 = vsel %vm1558, %v1905, %v1904
        %v1907 = vrot.slane %v1889, 4
        %v1908 = vsel %vm1561, %v1907, %v1906
        %v1909 = vrot.slane %v1890, 3
        %v1910 = vsel %vm1564, %v1909, %v1908
        %v1911 = vrot.slane %v1891, 2
        %v1912 = vsel %vm1567, %v1911, %v1910
        %v1913 = vrot.slane %v1892, 1
        %v1914 = vsel %vm1570, %v1913, %v1912
        %1915 = vrot.lane.b32.xlu0 %v1914, 64
        %v1916 = vpop.permute.xlu0 %1915
        %1918 = vst.msk [vmem:[#allocation6 + $0x18] sm:$0xff] %vm1623, %v1916
        %v1919 = vld [vmem:[#allocation6] sm:$0xff]
        %v1920 = vld [vmem:[#allocation6 + $0x8] sm:$0xff]
        %v1921 = vld [vmem:[#allocation6 + $0x10] sm:$0xff]
        %v1922 = vld [vmem:[#allocation6 + $0x18] sm:$0xff]
        %v1923 = vld [vmem:[%s5] sm:$0xff]
        %v1924 = vld [vmem:[%s5 + $0x8] sm:$0xff]
        %v1925 = vld [vmem:[%s5 + $0x10] sm:$0xff]
        %v1926 = vld [vmem:[%s5 + $0x18] sm:$0xff]
        %v1927 = vld [vmem:[%s5 + $0x20] sm:$0xff]
        %v1928 = vld [vmem:[%s5 + $0x28] sm:$0xff]
        %v1929 = vld [vmem:[%s5 + $0x30] sm:$0xff]
        %v1930 = vld [vmem:[%s5 + $0x38] sm:$0xff]
        %v1931 = vld [vmem:[%s5 + $0x40] sm:$0xff]
        %v1932 = vld [vmem:[%s5 + $0x48] sm:$0xff]
        %v1933 = vld [vmem:[%s5 + $0x50] sm:$0xff]
        %v1934 = vld [vmem:[%s5 + $0x58] sm:$0xff]
        %v1935 = vld [vmem:[%s5 + $0x60] sm:$0xff]
        %v1936 = vld [vmem:[%s5 + $0x68] sm:$0xff]
        %v1937 = vld [vmem:[%s5 + $0x70] sm:$0xff]
        %v1938 = vld [vmem:[%s5 + $0x78] sm:$0xff]
        %v1939 = vld [vmem:[%s5 + $0x80] sm:$0xff]
        %v1940 = vld [vmem:[%s5 + $0x88] sm:$0xff]
        %v1941 = vld [vmem:[%s5 + $0x90] sm:$0xff]
        %v1942 = vld [vmem:[%s5 + $0x98] sm:$0xff]
        %v1943 = vld [vmem:[%s5 + $0xa0] sm:$0xff]
        %v1944 = vld [vmem:[%s5 + $0xa8] sm:$0xff]
        %v1945 = vld [vmem:[%s5 + $0xb0] sm:$0xff]
        %v1946 = vld [vmem:[%s5 + $0xb8] sm:$0xff]
        %v1947 = vld [vmem:[%s5 + $0xc0] sm:$0xff]
        %v1948 = vld [vmem:[%s5 + $0xc8] sm:$0xff]
        %v1949 = vld [vmem:[%s5 + $0xd0] sm:$0xff]
        %v1950 = vld [vmem:[%s5 + $0xd8] sm:$0xff]
        %v1951 = vld [vmem:[%s5 + $0xe0] sm:$0xff]
        %v1952 = vld [vmem:[%s5 + $0xe8] sm:$0xff]
        %v1953 = vld [vmem:[%s5 + $0xf0] sm:$0xff]
        %v1954 = vld [vmem:[%s5 + $0xf8] sm:$0xff]
        %v1955 = vld [vmem:[%s5 + $0x100] sm:$0xff]
        %v1956 = vld [vmem:[%s5 + $0x108] sm:$0xff]
        %v1957 = vld [vmem:[%s5 + $0x110] sm:$0xff]
        %v1958 = vld [vmem:[%s5 + $0x118] sm:$0xff]
        %v1959 = vld [vmem:[%s5 + $0x120] sm:$0xff]
        %v1960 = vld [vmem:[%s5 + $0x128] sm:$0xff]
        %v1961 = vld [vmem:[%s5 + $0x130] sm:$0xff]
        %v1962 = vld [vmem:[%s5 + $0x138] sm:$0xff]
        %v1963 = vld [vmem:[%s5 + $0x140] sm:$0xff]
        %v1964 = vld [vmem:[%s5 + $0x148] sm:$0xff]
        %v1965 = vld [vmem:[%s5 + $0x150] sm:$0xff]
        %v1966 = vld [vmem:[%s5 + $0x158] sm:$0xff]
        %v1967 = vld [vmem:[%s5 + $0x160] sm:$0xff]
        %v1968 = vld [vmem:[%s5 + $0x168] sm:$0xff]
        %v1969 = vld [vmem:[%s5 + $0x170] sm:$0xff]
        %v1970 = vld [vmem:[%s5 + $0x178] sm:$0xff]
        %v1971 = vld [vmem:[%s5 + $0x180] sm:$0xff]
        %v1972 = vld [vmem:[%s5 + $0x188] sm:$0xff]
        %v1973 = vld [vmem:[%s5 + $0x190] sm:$0xff]
        %v1974 = vld [vmem:[%s5 + $0x198] sm:$0xff]
        %v1975 = vld [vmem:[%s5 + $0x1a0] sm:$0xff]
        %v1976 = vld [vmem:[%s5 + $0x1a8] sm:$0xff]
        %v1977 = vld [vmem:[%s5 + $0x1b0] sm:$0xff]
        %v1978 = vld [vmem:[%s5 + $0x1b8] sm:$0xff]
        %v1979 = vld [vmem:[%s5 + $0x1c0] sm:$0xff]
        %v1980 = vld [vmem:[%s5 + $0x1c8] sm:$0xff]
        %v1981 = vld [vmem:[%s5 + $0x1d0] sm:$0xff]
        %v1982 = vld [vmem:[%s5 + $0x1d8] sm:$0xff]
        %v1983 = vld [vmem:[%s5 + $0x1e0] sm:$0xff]
        %v1984 = vld [vmem:[%s5 + $0x1e8] sm:$0xff]
        %v1985 = vld [vmem:[%s5 + $0x1f0] sm:$0xff]
        %v1986 = vld [vmem:[%s5 + $0x1f8] sm:$0xff]
        %v1987 = vld [vmem:[%s6] sm:$0x1]
        %v1989 = vlaneseq
        %v1990 = vshrl.u32 %v1989, 7
        %v1991 = vsub.s32 0, %v1990
        %v1992 = vrot.slane %v1987, %v1991
        %1994 = vmatprep.subr.mxu0 0.0
        %1995 = vmatpush1.msra.mxu0 %v1923
        %1996 = vmatprep.subr.mxu0 0.0
        %1997 = vmatpush1.msra.mxu0 %v1924
        %1998 = vmatprep.subr.mxu0 0.0
        %1999 = vmatpush1.msra.mxu0 %v1925
        %2000 = vmatprep.subr.mxu0 0.0
        %2001 = vmatpush1.msra.mxu0 %v1926
        %2002 = vmatprep.subr.mxu0 0.0
        %2003 = vmatpush1.msra.mxu0 %v1927
        %2004 = vmatprep.subr.mxu0 0.0
        %2005 = vmatpush1.msra.mxu0 %v1928
        %2006 = vmatprep.subr.mxu0 0.0
        %2007 = vmatpush1.msra.mxu0 %v1929
        %2008 = vmatprep.subr.mxu0 0.0
        %2009 = vmatpush1.msra.mxu0 %v1930
        %2010 = vmatprep.subr.mxu0 0.0
        %2011 = vmatpush1.msra.mxu0 %v1931
        %2012 = vmatprep.subr.mxu0 0.0
        %2013 = vmatpush1.msra.mxu0 %v1932
        %2014 = vmatprep.subr.mxu0 0.0
        %2015 = vmatpush1.msra.mxu0 %v1933
        %2016 = vmatprep.subr.mxu0 0.0
        %2017 = vmatpush1.msra.mxu0 %v1934
        %2018 = vmatprep.subr.mxu0 0.0
        %2019 = vmatpush1.msra.mxu0 %v1935
        %2020 = vmatprep.subr.mxu0 0.0
        %2021 = vmatpush1.msra.mxu0 %v1936
        %2022 = vmatprep.subr.mxu0 0.0
        %2023 = vmatpush1.msra.mxu0 %v1937
        %2024 = vmatprep.subr.mxu0 0.0
        %2025 = vmatpush1.msra.mxu0 %v1938
        %2026 = vmatprep.subr.mxu0 0.0
        %2027 = vmatpush1.msra.mxu0 %v1939
        %2028 = vmatprep.subr.mxu0 0.0
        %2029 = vmatpush1.msra.mxu0 %v1940
        %2030 = vmatprep.subr.mxu0 0.0
        %2031 = vmatpush1.msra.mxu0 %v1941
        %2032 = vmatprep.subr.mxu0 0.0
        %2033 = vmatpush1.msra.mxu0 %v1942
        %2034 = vmatprep.subr.mxu0 0.0
        %2035 = vmatpush1.msra.mxu0 %v1943
        %2036 = vmatprep.subr.mxu0 0.0
        %2037 = vmatpush1.msra.mxu0 %v1944
        %2038 = vmatprep.subr.mxu0 0.0
        %2039 = vmatpush1.msra.mxu0 %v1945
        %2040 = vmatprep.subr.mxu0 0.0
        %2041 = vmatpush1.msra.mxu0 %v1946
        %2042 = vmatprep.subr.mxu0 0.0
        %2043 = vmatpush1.msra.mxu0 %v1947
        %2044 = vmatprep.subr.mxu0 0.0
        %2045 = vmatpush1.msra.mxu0 %v1948
        %2046 = vmatprep.subr.mxu0 0.0
        %2047 = vmatpush1.msra.mxu0 %v1949
        %2048 = vmatprep.subr.mxu0 0.0
        %2049 = vmatpush1.msra.mxu0 %v1950
        %2050 = vmatprep.subr.mxu0 0.0
        %2051 = vmatpush1.msra.mxu0 %v1951
        %2052 = vmatprep.subr.mxu0 0.0
        %2053 = vmatpush1.msra.mxu0 %v1952
        %2054 = vmatprep.subr.mxu0 0.0
        %2055 = vmatpush1.msra.mxu0 %v1953
        %2056 = vmatprep.subr.mxu0 0.0
        %2057 = vmatpush1.msra.mxu0 %v1954
        %2058 = vmatprep.mubr.f32.mxu0 %v1920
        %2059 = vmatmul.mubr.f32.gmra.mrb[0].mxu0 %v1919
        %v2060 = vpop.f32.mrb[0].mxu0
        %v2061 = vadd.f32 %v1992, %v2060
        %v2062 = vpop.f32.mrb[0].mxu0
        %2063 = vdwg.mxu0
        %2064 = vmatprep.subr.mxu0 0.0
        %2065 = vmatpush1.msra.mxu0 %v1955
        %2066 = vmatprep.subr.mxu0 0.0
        %2067 = vmatpush1.msra.mxu0 %v1956
        %2068 = vmatprep.subr.mxu0 0.0
        %2069 = vmatpush1.msra.mxu0 %v1957
        %2070 = vmatprep.subr.mxu0 0.0
        %2071 = vmatpush1.msra.mxu0 %v1958
        %2072 = vmatprep.subr.mxu0 0.0
        %2073 = vmatpush1.msra.mxu0 %v1959
        %2074 = vmatprep.subr.mxu0 0.0
        %2075 = vmatpush1.msra.mxu0 %v1960
        %2076 = vmatprep.subr.mxu0 0.0
        %2077 = vmatpush1.msra.mxu0 %v1961
        %2078 = vmatprep.subr.mxu0 0.0
        %2079 = vmatpush1.msra.mxu0 %v1962
        %2080 = vmatprep.subr.mxu0 0.0
        %2081 = vmatpush1.msra.mxu0 %v1963
        %2082 = vmatprep.subr.mxu0 0.0
        %2083 = vmatpush1.msra.mxu0 %v1964
        %2084 = vmatprep.subr.mxu0 0.0
        %2085 = vmatpush1.msra.mxu0 %v1965
        %2086 = vmatprep.subr.mxu0 0.0
        %2087 = vmatpush1.msra.mxu0 %v1966
        %2088 = vmatprep.subr.mxu0 0.0
        %2089 = vmatpush1.msra.mxu0 %v1967
        %2090 = vmatprep.subr.mxu0 0.0
        %2091 = vmatpush1.msra.mxu0 %v1968
        %2092 = vmatprep.subr.mxu0 0.0
        %2093 = vmatpush1.msra.mxu0 %v1969
        %2094 = vmatprep.subr.mxu0 0.0
        %2095 = vmatpush1.msra.mxu0 %v1970
        %2096 = vmatprep.subr.mxu0 0.0
        %2097 = vmatpush1.msra.mxu0 %v1971
        %2098 = vmatprep.subr.mxu0 0.0
        %2099 = vmatpush1.msra.mxu0 %v1972
        %2100 = vmatprep.subr.mxu0 0.0
        %2101 = vmatpush1.msra.mxu0 %v1973
        %2102 = vmatprep.subr.mxu0 0.0
        %2103 = vmatpush1.msra.mxu0 %v1974
        %2104 = vmatprep.subr.mxu0 0.0
        %2105 = vmatpush1.msra.mxu0 %v1975
        %2106 = vmatprep.subr.mxu0 0.0
        %2107 = vmatpush1.msra.mxu0 %v1976
        %2108 = vmatprep.subr.mxu0 0.0
        %2109 = vmatpush1.msra.mxu0 %v1977
        %2110 = vmatprep.subr.mxu0 0.0
        %2111 = vmatpush1.msra.mxu0 %v1978
        %2112 = vmatprep.subr.mxu0 0.0
        %2113 = vmatpush1.msra.mxu0 %v1979
        %2114 = vmatprep.subr.mxu0 0.0
        %2115 = vmatpush1.msra.mxu0 %v1980
        %2116 = vmatprep.subr.mxu0 0.0
        %2117 = vmatpush1.msra.mxu0 %v1981
        %2118 = vmatprep.subr.mxu0 0.0
        %2119 = vmatpush1.msra.mxu0 %v1982
        %2120 = vmatprep.subr.mxu0 0.0
        %2121 = vmatpush1.msra.mxu0 %v1983
        %2122 = vmatprep.subr.mxu0 0.0
        %2123 = vmatpush1.msra.mxu0 %v1984
        %2124 = vmatprep.subr.mxu0 0.0
        %2125 = vmatpush1.msra.mxu0 %v1985
        %2126 = vmatprep.subr.mxu0 0.0
        %2127 = vmatpush1.msra.mxu0 %v1986
        %2128 = vmatprep.mubr.f32.mxu0 %v1922
        %2129 = vmatmul.mubr.f32.gmra.mrb[0].mxu0 %v1921
        %v2130 = vpop.f32.mrb[0].mxu0
        %v2131 = vadd.f32 %v2061, %v2130
        %v2132 = vpop.f32.mrb[0].mxu0
        %2133 = vdwg.mxu0
        %2134 = vst [vmem:[%s274] sm:$0xff] %v2131
        %s2135 = sand.u32 %s181, 1
        %s2136 = scalar_lea.sflag [#allocation8], %s2135
        %s2137 = sand.u32 %s181, 1
        %s2138 = smul.addr %s2137, 8
        %s2139 = scalar_lea.vmem [#allocation7], %s2138
        // Predicated region
        $region49: #{tpu_custom_call.1} parent=47 // pred_check
          %p2140 = pneg %p191
        $region50: #{tpu_custom_call.1} parent=47 // pred_check_branch
          %2142 = sbr.rel (%p2140) target = $region52
        $region51: #{tpu_custom_call.1} parent=47 // pred_region
          %s2144 = ssub.s32 128, 128
          %2145 = vsyncadd %s2136, %s2144
          %s2146 = smul.addr %s21, 128
          %s2147 = scalar_lea.hbm %s7, %s2146
          %s2149 = sshll.u32 %s2139, 4
          %s2150 = int_to_ptr.vmem [resolvable:$true] %s2149
          %2152 = dma.vmem_to_hbm [thread:$0]  %s2150, 128, %s2147, %s2136
        $region52: #{tpu_custom_call.1} parent=47 // pred_fallthru
          _
      $region48: #{tpu_custom_call.1} parent=5 // pred_fallthru
        _
      %p2153 = scmp.le.s32.totalorder 2, %s16
      // Predicated region
      $region53: #{tpu_custom_call.1} parent=5 // pred_check
        %p2154 = pneg %p2153
      $region54: #{tpu_custom_call.1} parent=5 // pred_check_branch
        %2156 = sbr.rel (%p2154) target = $region56
      $region55: #{tpu_custom_call.1} parent=5 // pred_region
        %s2157 = ssub.s32 %s16, 2
        // Predicated region
        $region57: #{tpu_custom_call.1} parent=55 // pred_check
          %p2158 = pneg %p197
        $region58: #{tpu_custom_call.1} parent=55 // pred_check_branch
          %2160 = sbr.rel (%p2158) target = $region60
        $region59: #{tpu_custom_call.1} parent=55 // pred_region
          %s2161 = sand.u32 %s182, 1
          %s2162 = scalar_lea.sflag [#allocation8], %s2161
          %s2163 = sand.u32 %s182, 1
          %s2164 = smul.addr %s2163, 8
          %s2165 = scalar_lea.vmem [#allocation7], %s2164
          %2166 = dma.done %s2162, 128
        $region60: #{tpu_custom_call.1} parent=55 // pred_fallthru
          _
      $region56: #{tpu_custom_call.1} parent=5 // pred_fallthru
        _
    $region6: #{tpu_custom_call.1} parent=1 // loop_footer
      %s20 = sadd.s32 1, %s16
    $region7: #{tpu_custom_call.1} parent=1 // loop_footer_branch
      %15 = sbr.rel target = $region3
    $region8: #{tpu_custom_call.1} parent=1 // loop_exit
      _
    %2167 = vsyncpa [#allocation8], 1
    %s2168 = scalar_lea.sflag [#allocation8], 1
    %2169 = vsyncpa %s2168, 1

</llo_original>
